<compile_context>
chip_gen: v7x
topology: tpu7x:2x2x1
jax: 0.10.0
libtpu: 0.0.40
codegen_flags: <defaults>
</compile_context>

<pallas_src>
import numpy as np
import jax
import jax.numpy as jnp
from jax import lax
from jax.experimental import pallas as pl
from jax.experimental.pallas import tpu as pltpu

# ------------------------------- shapes -------------------------------------
B = 2
H = 16
W = 2                         # == dim  (grid_sample needs trailing grid dim == 2)
C = 2                         # == dim  (proj_k input feature dim)
DIM = 2
OFFSET_DIM = 8                # 2*OFFSET_DIM*2 == H*W  ->  grid reshape -> (B,1,H,2)
M = H * W                     # 32 query tokens per batch element
O = 2 * OFFSET_DIM            # 16 conv_offset channels == number of sampled tokens
SCALE = DIM ** (-0.5)

assert W == DIM == C
assert (2 * O) % (H * W) == 0 and (2 * O) // (H * W) == 1    # grid -> (B, 1, H, 2)

LOG2_M = M.bit_length() - 1
LOG2_O = O.bit_length() - 1
assert (1 << LOG2_M) == M and (1 << LOG2_O) == O             # shifts instead of int div

# parameter-slab row layout (single (RSLAB, 128) f32 array, one DMA)
R_WQ = 0                      # rows [0, 64)    wq_big (B*M,B*M) cols 0:64 ; bq col 64
R_W3 = B * M                  # rows [64, 160)  stacked conv taps kron(I_B, wc_k); bc col 64
R_TAIL = R_W3 + 3 * B * O     # rows [160, 168) w_kvT / b_kv / woT / bo
RSLAB = R_TAIL + 8


# ------------------------------- kernel --------------------------------------
def _swin_deform_attn_kernel(xt_ref, slab_ref, out_ref):
    f32 = jnp.float32

    # ---- parameter views (one slab, one DMA; 8-row-aligned band loads) ------
    wq_big = slab_ref[0:B * M, 0:B * M]                       # (64, 64) kron(I_{B*H}, wq)
    bq = slab_ref[0:B * M, B * M:B * M + 1]                   # (64, 1)
    w3 = slab_ref[R_W3:R_W3 + 3 * B * O, 0:B * M]             # (96, 64) taps k=0,1,2 stacked
    bc = slab_ref[R_W3:R_W3 + B * O, B * M:B * M + 1]         # (32, 1)
    tail = slab_ref[R_TAIL:R_TAIL + 8, :]                     # (8, 128)
    w_kvT = tail[0:DIM, 0:2 * DIM]                            # (2, 4) [SCALE*wk.T | wv.T]
    b_kv = tail[DIM:DIM + 1, 0:2 * DIM]                       # (1, 4) [SCALE*bk   | bv  ]
    woT = tail[DIM + 1:2 * DIM + 1, 0:DIM]                    # (2, 2)
    bo = tail[2 * DIM + 1:2 * DIM + 2, 0:DIM]                 # (1, 2)

    xt = xt_ref[...]                                          # (B*M, C)

    # ---- proj_q: nn.Linear over the last (W) axis, both batch elems at once --
    q = jnp.dot(wq_big, xt, preferred_element_type=f32) + bq  # (B*M, C)

    # ---- conv_offset: Conv1d(k=3, pad=1) along the length-C axis -------------
    # all 3 taps x both batch elements merged into ONE matmul; the +/-1 column
    # shifts (C == 2) are realized as where/iota lane placement (VPU, no MXU).
    t = jnp.dot(w3, q, preferred_element_type=f32)            # (3*B*O, C)
    t0 = t[0:B * O]                                           # tap k=0 -> output column l=1
    t1 = t[B * O:2 * B * O]                                    # tap k=1 -> both columns
    t2 = t[2 * B * O:3 * B * O]                                # tap k=2 -> output column l=0
    lane_c = lax.broadcasted_iota(jnp.int32, (B * O, C), 1)
    off_all = (bc + t1
               + jnp.where(lane_c == 1, t0[:, 0:1], 0.0)
               + jnp.where(lane_c == 0, t2[:, 1:2], 0.0))      # (B*O, C)

    # ---- F.grid_sample(bilinear, align_corners=True, zero padding) -----------
    # grid = offset[..., (1,0)].reshape(B,1,H,2): x-coord = off[:,1], y = off[:,0]
    # Whole batch at once: a block-diagonal (B*O, B*M) sampling matrix built on
    # the VPU (iota/where), then a single MXU push against the token matrix.
    gx = off_all[:, 1:2]                                      # (B*O, 1)
    gy = off_all[:, 0:1]
    ix = (gx + 1.0) * (0.5 * (W - 1))
    iy = (gy + 1.0) * (0.5 * (H - 1))
    x0f = jnp.floor(ix)
    y0f = jnp.floor(iy)
    wx1 = ix - x0f
    wx0 = 1.0 - wx1
    wy1 = iy - y0f
    wy0 = 1.0 - wy1
    x0 = x0f.astype(jnp.int32)
    y0 = y0f.astype(jnp.int32)
    rowb = jnp.right_shift(
        lax.broadcasted_iota(jnp.int32, (B * O, 1), 0), LOG2_O)   # batch id per sample row
    colg = lax.broadcasted_iota(jnp.int32, (B * O, B * M), 1)     # global token column id
    samp = jnp.zeros((B * O, B * M), f32)
    for dy, dx, wgt in ((0, 0, wy0 * wx0), (0, 1, wy0 * wx1),
                        (1, 0, wy1 * wx0), (1, 1, wy1 * wx1)):
        xc = x0 + dx
        yc = y0 + dy
        inb = (xc >= 0) & (xc <= W - 1) & (yc >= 0) & (yc <= H - 1)
        flat = rowb * M + yc * W + xc                             # in-batch token index
        samp = samp + jnp.where((colg == flat) & inb, wgt, 0.0)
    x_s = jnp.dot(samp, xt, preferred_element_type=f32)           # (B*O, C) sampled tokens

    # ---- fused K|V projection (SCALE already folded into K weights) ----------
    kv = jnp.dot(x_s, w_kvT, preferred_element_type=f32) + b_kv   # (B*O, 2*DIM)

    # ---- attention: whole batch in one shot with a block-diagonal mask -------
    logits = jnp.einsum("mc,nc->mn", q, kv[:, 0:DIM],
                        preferred_element_type=f32)               # (B*M, B*O)
    rb = jnp.right_shift(
        lax.broadcasted_iota(jnp.int32, (B * M, B * O), 0), LOG2_M)
    cb = jnp.right_shift(
        lax.broadcasted_iota(jnp.int32, (B * M, B * O), 1), LOG2_O)
    logits = jnp.where(rb == cb, logits, -1e30)                   # mask cross-batch blocks
    logits = logits - jnp.max(logits, axis=-1, keepdims=True)
    e = jnp.exp(logits)
    attn = e * pl.reciprocal(jnp.sum(e, axis=-1, keepdims=True), approx=True)
    # TODO(synk): nn.Dropout(0.1) has no deterministic equivalent; eval-mode identity.
    ctx = jnp.dot(attn, kv[:, DIM:2 * DIM],
                  preferred_element_type=f32)                     # (B*M, DIM)

    out = jnp.dot(ctx, woT, preferred_element_type=f32) + bo      # (B*M, DIM)

    # ---- single lane-dense packed store ---------------------------------------
    # rows per batch: [out (M rows) ; offset (O rows)]; the C=2 data lanes are
    # scattered into a full 128-lane row via a tiny matmul (unmasked full store).
    block = jnp.concatenate(
        [out[0:M], off_all[0:O], out[M:2 * M], off_all[O:2 * O]], axis=0)    # (96, C)
    er = lax.broadcasted_iota(jnp.int32, (C, 128), 0)
    ec = lax.broadcasted_iota(jnp.int32, (C, 128), 1)
    expand = (er == ec).astype(f32)                                          # (C, 128)
    out_ref[...] = jnp.dot(block, expand, preferred_element_type=f32)        # (96, 128)


# ------------------------------- wrapper --------------------------------------
def _build_slab(p):
    f32 = jnp.float32
    wq_big = jnp.kron(jnp.eye(B * H, dtype=f32), p["wq"].astype(f32))       # (64, 64)
    bq_col = jnp.tile(p["bq"].astype(f32), B * H)[:, None]                   # (64, 1)
    wc = p["conv_w"].astype(f32)                                             # (O, M, 3)
    eye_b = jnp.eye(B, dtype=f32)
    w3 = jnp.concatenate([jnp.kron(eye_b, wc[:, :, k]) for k in range(3)], axis=0)  # (96, 64)
    bc_tile = jnp.tile(p["conv_b"].astype(f32), B)[:, None]                  # (32, 1)
    wk_s = SCALE * p["wk"].astype(f32)                                       # fold q*SCALE into K
    bk_s = SCALE * p["bk"].astype(f32)
    w_kvT = jnp.concatenate([wk_s.T, p["wv"].astype(f32).T], axis=1)         # (2, 4)
    b_kv = jnp.concatenate([bk_s, p["bv"].astype(f32)])[None, :]             # (1, 4)
    woT = p["wo"].astype(f32).T                                              # (2, 2)
    bo = p["bo"].astype(f32)[None, :]                                        # (1, 2)

    slab = jnp.zeros((RSLAB, 128), f32)
    slab = slab.at[0:B * M, 0:B * M].set(wq_big)
    slab = slab.at[0:B * M, B * M:B * M + 1].set(bq_col)
    slab = slab.at[R_W3:R_W3 + 3 * B * O, 0:B * M].set(w3)
    slab = slab.at[R_W3:R_W3 + B * O, B * M:B * M + 1].set(bc_tile)
    slab = slab.at[R_TAIL:R_TAIL + DIM, 0:2 * DIM].set(w_kvT)
    slab = slab.at[R_TAIL + DIM:R_TAIL + DIM + 1, 0:2 * DIM].set(b_kv)
    slab = slab.at[R_TAIL + DIM + 1:R_TAIL + 2 * DIM + 1, 0:DIM].set(woT)
    slab = slab.at[R_TAIL + 2 * DIM + 1:R_TAIL + 2 * DIM + 2, 0:DIM].set(bo)
    return slab


def swin_deformable_attention(x, params):
    b, c, h, w = x.shape
    assert (b, c, h, w) == (B, C, H, W)
    xt = jnp.transpose(x, (0, 2, 3, 1)).reshape(B * M, C).astype(jnp.float32)
    slab = _build_slab(params)

    packed = pl.pallas_call(
        _swin_deform_attn_kernel,
        grid=(1,),                                    # single grid step: whole batch per invocation
        in_specs=[pl.BlockSpec((B * M, C), lambda i: (0, 0)),
                  pl.BlockSpec((RSLAB, 128), lambda i: (0, 0))],
        out_specs=pl.BlockSpec((B * (M + O), 128), lambda i: (0, 0)),
        out_shape=jax.ShapeDtypeStruct((B * (M + O), 128), jnp.float32),
        compiler_params=pltpu.CompilerParams(dimension_semantics=("arbitrary",)),
    )(xt, slab)

    packed = packed.reshape(B, M + O, 128)
    out = packed[:, :M, :DIM]
    offset = packed[:, M:M + O, :C]
    return out, offset


# --------------------------- pure-JAX reference --------------------------------
def _grid_sample_bilinear_ref(x, grid):
    b, c, hin, win = x.shape
    gx = grid[..., 0]
    gy = grid[..., 1]
    ix = (gx + 1.0) * 0.5 * (win - 1)
    iy = (gy + 1.0) * 0.5 * (hin - 1)
    x0 = jnp.floor(ix)
    y0 = jnp.floor(iy)
    wx1 = ix - x0
    wx0 = 1.0 - wx1
    wy1 = iy - y0
    wy0 = 1.0 - wy1

    def corner(yc, xc, wgt):
        inb = (xc >= 0) & (xc <= win - 1) & (yc >= 0) & (yc <= hin - 1)
        xi = jnp.clip(xc, 0, win - 1).astype(jnp.int32)
        yi = jnp.clip(yc, 0, hin - 1).astype(jnp.int32)
        vals = jax.vmap(lambda img, yy, xx: img[:, yy, xx])(x, yi, xi)   # (B,C,Ho,Wo)
        return vals * (wgt * inb.astype(x.dtype))[:, None]

    return (corner(y0, x0, wy0 * wx0) + corner(y0, x0 + 1, wy0 * wx1)
            + corner(y0 + 1, x0, wy1 * wx0) + corner(y0 + 1, x0 + 1, wy1 * wx1))


def reference_forward(x, p):
    HI = jax.lax.Precision.HIGHEST       # golden reference in (near-)f32 precision
    b, c, h, w = x.shape
    q_pre = jnp.einsum("bchw,vw->bchv", x, p["wq"], precision=HI) + p["bq"]
    q = q_pre.reshape(b, -1, h * w).transpose(0, 2, 1)            # (B, HW, C)
    qpad = jnp.pad(q, ((0, 0), (0, 0), (1, 1)))
    offset = p["conv_b"][None, :, None] + sum(
        jnp.einsum("om,bml->bol", p["conv_w"][:, :, k], qpad[:, :, k:k + c], precision=HI)
        for k in range(3))                                        # (B, 2*offset_dim, C)
    grid = offset[:, :, jnp.array([1, 0])].reshape(b, -1, h, w)   # (B, 1, H, 2)
    xs = _grid_sample_bilinear_ref(x, grid)                       # (B, C, 1, H)
    xs = xs.reshape(b, c, -1).transpose(0, 2, 1)                  # (B, N, C)
    k_ = jnp.einsum("bnc,dc->bnd", xs, p["wk"], precision=HI) + p["bk"]
    v_ = jnp.einsum("bnc,dc->bnd", xs, p["wv"], precision=HI) + p["bv"]
    attn = jnp.einsum("bmc,bnc->bmn", q * SCALE, k_, precision=HI)
    attn = jax.nn.softmax(attn, axis=-1)
    ctx = jnp.einsum("bmn,bnc->bmc", attn, v_, precision=HI)
    out = jnp.einsum("bmc,dc->bmd", ctx, p["wo"], precision=HI) + p["bo"]
    return out, offset


# ----------------------------------- main --------------------------------------
if __name__ == "__main__":
    key = jax.random.PRNGKey(0)
    ks = jax.random.split(key, 12)
    params = {
        "wq": 0.3 * jax.random.normal(ks[0], (DIM, DIM), jnp.float32),
        "bq": 0.1 * jax.random.normal(ks[1], (DIM,), jnp.float32),
        "wk": 0.3 * jax.random.normal(ks[2], (DIM, DIM), jnp.float32),
        "bk": 0.1 * jax.random.normal(ks[3], (DIM,), jnp.float32),
        "wv": 0.3 * jax.random.normal(ks[4], (DIM, DIM), jnp.float32),
        "bv": 0.1 * jax.random.normal(ks[5], (DIM,), jnp.float32),
        "wo": 0.3 * jax.random.normal(ks[6], (DIM, DIM), jnp.float32),
        "bo": 0.1 * jax.random.normal(ks[7], (DIM,), jnp.float32),
        "conv_w": 0.1 * jax.random.normal(ks[8], (O, M, 3), jnp.float32),
        "conv_b": 0.05 * jax.random.normal(ks[9], (O,), jnp.float32),
    }
    x = jax.random.normal(ks[10], (B, C, H, W), jnp.float32)

    fwd = jax.jit(swin_deformable_attention)
    out, offset = jax.block_until_ready(fwd(x, params))
    out_ref, offset_ref = reference_forward(x, params)

    # kernel matmuls run at default (single-pass bf16) MXU precision, so the
    # tolerance is slightly looser than an f32 "highest"-precision build.
    np.testing.assert_allclose(np.asarray(offset), np.asarray(offset_ref),
                               rtol=3e-2, atol=3e-2)
    np.testing.assert_allclose(np.asarray(out), np.asarray(out_ref),
                               rtol=3e-2, atol=3e-2)
    print("KERNEL_OK")
</pallas_src>

<mosaic_0001>
module attributes {stable_mosaic.version = 11 : i64} {
  func.func @_swin_deform_attn_kernel(%arg0: i32, %arg1: memref<64x2xf32, #tpu.memory_space<vmem>>, %arg2: memref<168x128xf32, #tpu.memory_space<vmem>>, %arg3: memref<96x128xf32, #tpu.memory_space<vmem>>) attributes {dimension_semantics = [#tpu.dimension_semantics<arbitrary>], iteration_bounds = array<i64: 1>, scalar_prefetch = 0 : i64, scratch_operands = 0 : i64, tpu.core_type = #tpu.core_type<tc>, window_params = [{pipeline_mode = #tpu.pipeline_mode<synchronous>, transform_indices = @transform_0, window_bounds = array<i64: 64, 2>}, {pipeline_mode = #tpu.pipeline_mode<synchronous>, transform_indices = @transform_1, window_bounds = array<i64: 168, 128>}, {pipeline_mode = #tpu.pipeline_mode<synchronous>, transform_indices = @transform_2, window_bounds = array<i64: 96, 128>}]} {
    %c0 = arith.constant 0 : index
    %c0_0 = arith.constant 0 : index
    %0 = vector.load %arg2[%c0, %c0_0] : memref<168x128xf32, #tpu.memory_space<vmem>>, vector<64x64xf32>
    %c0_1 = arith.constant 0 : index
    %c64 = arith.constant 64 : index
    %1 = vector.load %arg2[%c0_1, %c64] : memref<168x128xf32, #tpu.memory_space<vmem>>, vector<64x1xf32>
    %c64_2 = arith.constant 64 : index
    %c0_3 = arith.constant 0 : index
    %2 = vector.load %arg2[%c64_2, %c0_3] : memref<168x128xf32, #tpu.memory_space<vmem>>, vector<96x64xf32>
    %c64_4 = arith.constant 64 : index
    %c64_5 = arith.constant 64 : index
    %3 = vector.load %arg2[%c64_4, %c64_5] : memref<168x128xf32, #tpu.memory_space<vmem>>, vector<32x1xf32>
    %c160 = arith.constant 160 : index
    %c0_6 = arith.constant 0 : index
    %4 = vector.load %arg2[%c160, %c0_6] : memref<168x128xf32, #tpu.memory_space<vmem>>, vector<8x128xf32>
    %5 = vector.extract_strided_slice %4 {offsets = [0, 0], sizes = [2, 4], strides = [1, 1]} : vector<8x128xf32> to vector<2x4xf32>
    %6 = vector.extract_strided_slice %4 {offsets = [2, 0], sizes = [1, 4], strides = [1, 1]} : vector<8x128xf32> to vector<1x4xf32>
    %7 = vector.extract_strided_slice %4 {offsets = [3, 0], sizes = [2, 2], strides = [1, 1]} : vector<8x128xf32> to vector<2x2xf32>
    %8 = vector.extract_strided_slice %4 {offsets = [5, 0], sizes = [1, 2], strides = [1, 1]} : vector<8x128xf32> to vector<1x2xf32>
    %c0_7 = arith.constant 0 : index
    %c0_8 = arith.constant 0 : index
    %9 = vector.load %arg1[%c0_7, %c0_8] : memref<64x2xf32, #tpu.memory_space<vmem>>, vector<64x2xf32>
    %cst = arith.constant dense<0.000000e+00> : vector<64x2xf32>
    %10 = tpu.matmul %0, %9, %cst {dimension_numbers = #tpu.dot_dimension_numbers<[1], [0], [0], [1], [0, 0, 1, 1], [], []>} : vector<64x64xf32>, vector<64x2xf32>, vector<64x2xf32> -> vector<64x2xf32>
    %11 = vector.broadcast %1 : vector<64x1xf32> to vector<64x2xf32>
    %12 = arith.addf %10, %11 : vector<64x2xf32>
    %cst_9 = arith.constant dense<0.000000e+00> : vector<96x2xf32>
    %13 = tpu.matmul %2, %12, %cst_9 {dimension_numbers = #tpu.dot_dimension_numbers<[1], [0], [0], [1], [0, 0, 1, 1], [], []>} : vector<96x64xf32>, vector<64x2xf32>, vector<96x2xf32> -> vector<96x2xf32>
    %14 = vector.extract_strided_slice %13 {offsets = [0, 0], sizes = [32, 2], strides = [1, 1]} : vector<96x2xf32> to vector<32x2xf32>
    %15 = vector.extract_strided_slice %13 {offsets = [32, 0], sizes = [32, 2], strides = [1, 1]} : vector<96x2xf32> to vector<32x2xf32>
    %16 = vector.extract_strided_slice %13 {offsets = [64, 0], sizes = [32, 2], strides = [1, 1]} : vector<96x2xf32> to vector<32x2xf32>
    %17 = tpu.iota {dimensions = array<i32: 1>} : vector<32x2xi32>
    %18 = vector.broadcast %3 : vector<32x1xf32> to vector<32x2xf32>
    %19 = arith.addf %18, %15 : vector<32x2xf32>
    %c1_i32 = arith.constant 1 : i32
    %20 = vector.broadcast %c1_i32 : i32 to vector<32x2xi32>
    %21 = arith.cmpi eq, %17, %20 : vector<32x2xi32>
    %22 = vector.extract_strided_slice %14 {offsets = [0, 0], sizes = [32, 1], strides = [1, 1]} : vector<32x2xf32> to vector<32x1xf32>
    %cst_10 = arith.constant 0.000000e+00 : f32
    %23 = vector.shape_cast %22 : vector<32x1xf32> to vector<32x1xf32>
    %24 = vector.broadcast %23 : vector<32x1xf32> to vector<32x2xf32>
    %25 = vector.broadcast %cst_10 : f32 to vector<32x2xf32>
    %26 = arith.select %21, %24, %25 : vector<32x2xi1>, vector<32x2xf32>
    %27 = arith.addf %19, %26 : vector<32x2xf32>
    %c0_i32 = arith.constant 0 : i32
    %28 = vector.broadcast %c0_i32 : i32 to vector<32x2xi32>
    %29 = arith.cmpi eq, %17, %28 : vector<32x2xi32>
    %30 = vector.extract_strided_slice %16 {offsets = [0, 1], sizes = [32, 1], strides = [1, 1]} : vector<32x2xf32> to vector<32x1xf32>
    %cst_11 = arith.constant 0.000000e+00 : f32
    %31 = vector.shape_cast %30 : vector<32x1xf32> to vector<32x1xf32>
    %32 = vector.broadcast %31 : vector<32x1xf32> to vector<32x2xf32>
    %33 = vector.broadcast %cst_11 : f32 to vector<32x2xf32>
    %34 = arith.select %29, %32, %33 : vector<32x2xi1>, vector<32x2xf32>
    %35 = arith.addf %27, %34 : vector<32x2xf32>
    %36 = vector.extract_strided_slice %35 {offsets = [0, 1], sizes = [32, 1], strides = [1, 1]} : vector<32x2xf32> to vector<32x1xf32>
    %37 = vector.extract_strided_slice %35 {offsets = [0, 0], sizes = [32, 1], strides = [1, 1]} : vector<32x2xf32> to vector<32x1xf32>
    %cst_12 = arith.constant 1.000000e+00 : f32
    %38 = vector.broadcast %cst_12 : f32 to vector<32x1xf32>
    %39 = arith.addf %36, %38 : vector<32x1xf32>
    %cst_13 = arith.constant 5.000000e-01 : f32
    %40 = vector.broadcast %cst_13 : f32 to vector<32x1xf32>
    %41 = arith.mulf %39, %40 : vector<32x1xf32>
    %cst_14 = arith.constant 1.000000e+00 : f32
    %42 = vector.broadcast %cst_14 : f32 to vector<32x1xf32>
    %43 = arith.addf %37, %42 : vector<32x1xf32>
    %cst_15 = arith.constant 7.500000e+00 : f32
    %44 = vector.broadcast %cst_15 : f32 to vector<32x1xf32>
    %45 = arith.mulf %43, %44 : vector<32x1xf32>
    %46 = math.floor %41 : vector<32x1xf32>
    %47 = math.floor %45 : vector<32x1xf32>
    %48 = arith.subf %41, %46 : vector<32x1xf32>
    %cst_16 = arith.constant 1.000000e+00 : f32
    %49 = vector.broadcast %cst_16 : f32 to vector<32x1xf32>
    %50 = arith.subf %49, %48 : vector<32x1xf32>
    %51 = arith.subf %45, %47 : vector<32x1xf32>
    %cst_17 = arith.constant 1.000000e+00 : f32
    %52 = vector.broadcast %cst_17 : f32 to vector<32x1xf32>
    %53 = arith.subf %52, %51 : vector<32x1xf32>
    %54 = arith.fptosi %46 : vector<32x1xf32> to vector<32x1xi32>
    %55 = arith.fptosi %47 : vector<32x1xf32> to vector<32x1xi32>
    %56 = tpu.iota {dimensions = array<i32: 0>} : vector<32x1xi32>
    %c4_i32 = arith.constant 4 : i32
    %57 = vector.broadcast %c4_i32 : i32 to vector<32x1xi32>
    %58 = arith.shrsi %56, %57 : vector<32x1xi32>
    %59 = tpu.iota {dimensions = array<i32: 1>} : vector<32x64xi32>
    %cst_18 = arith.constant 0.000000e+00 : f32
    %60 = vector.broadcast %cst_18 : f32 to vector<32x64xf32>
    %61 = arith.mulf %53, %50 : vector<32x1xf32>
    %62 = arith.mulf %53, %48 : vector<32x1xf32>
    %63 = arith.mulf %51, %50 : vector<32x1xf32>
    %64 = arith.mulf %51, %48 : vector<32x1xf32>
    %c0_i32_19 = arith.constant 0 : i32
    %65 = vector.broadcast %c0_i32_19 : i32 to vector<32x1xi32>
    %66 = arith.addi %54, %65 : vector<32x1xi32>
    %c0_i32_20 = arith.constant 0 : i32
    %67 = vector.broadcast %c0_i32_20 : i32 to vector<32x1xi32>
    %68 = arith.addi %55, %67 : vector<32x1xi32>
    %c0_i32_21 = arith.constant 0 : i32
    %69 = vector.broadcast %c0_i32_21 : i32 to vector<32x1xi32>
    %70 = arith.cmpi sge, %66, %69 : vector<32x1xi32>
    %c1_i32_22 = arith.constant 1 : i32
    %71 = vector.broadcast %c1_i32_22 : i32 to vector<32x1xi32>
    %72 = arith.cmpi sle, %66, %71 : vector<32x1xi32>
    %73 = arith.andi %70, %72 : vector<32x1xi1>
    %c0_i32_23 = arith.constant 0 : i32
    %74 = vector.broadcast %c0_i32_23 : i32 to vector<32x1xi32>
    %75 = arith.cmpi sge, %68, %74 : vector<32x1xi32>
    %76 = arith.andi %73, %75 : vector<32x1xi1>
    %c15_i32 = arith.constant 15 : i32
    %77 = vector.broadcast %c15_i32 : i32 to vector<32x1xi32>
    %78 = arith.cmpi sle, %68, %77 : vector<32x1xi32>
    %79 = arith.andi %76, %78 : vector<32x1xi1>
    %c32_i32 = arith.constant 32 : i32
    %80 = vector.broadcast %c32_i32 : i32 to vector<32x1xi32>
    %81 = arith.muli %58, %80 : vector<32x1xi32>
    %c2_i32 = arith.constant 2 : i32
    %82 = vector.broadcast %c2_i32 : i32 to vector<32x1xi32>
    %83 = arith.muli %68, %82 : vector<32x1xi32>
    %84 = arith.addi %81, %83 : vector<32x1xi32>
    %85 = arith.addi %84, %66 : vector<32x1xi32>
    %86 = vector.broadcast %85 : vector<32x1xi32> to vector<32x64xi32>
    %87 = arith.cmpi eq, %59, %86 : vector<32x64xi32>
    %88 = vector.broadcast %79 : vector<32x1xi1> to vector<32x64xi1>
    %89 = arith.andi %87, %88 : vector<32x64xi1>
    %cst_24 = arith.constant 0.000000e+00 : f32
    %90 = vector.shape_cast %61 : vector<32x1xf32> to vector<32x1xf32>
    %91 = vector.broadcast %90 : vector<32x1xf32> to vector<32x64xf32>
    %92 = vector.broadcast %cst_24 : f32 to vector<32x64xf32>
    %93 = arith.select %89, %91, %92 : vector<32x64xi1>, vector<32x64xf32>
    %94 = arith.addf %60, %93 : vector<32x64xf32>
    %c1_i32_25 = arith.constant 1 : i32
    %95 = vector.broadcast %c1_i32_25 : i32 to vector<32x1xi32>
    %96 = arith.addi %54, %95 : vector<32x1xi32>
    %c0_i32_26 = arith.constant 0 : i32
    %97 = vector.broadcast %c0_i32_26 : i32 to vector<32x1xi32>
    %98 = arith.addi %55, %97 : vector<32x1xi32>
    %c0_i32_27 = arith.constant 0 : i32
    %99 = vector.broadcast %c0_i32_27 : i32 to vector<32x1xi32>
    %100 = arith.cmpi sge, %96, %99 : vector<32x1xi32>
    %c1_i32_28 = arith.constant 1 : i32
    %101 = vector.broadcast %c1_i32_28 : i32 to vector<32x1xi32>
    %102 = arith.cmpi sle, %96, %101 : vector<32x1xi32>
    %103 = arith.andi %100, %102 : vector<32x1xi1>
    %c0_i32_29 = arith.constant 0 : i32
    %104 = vector.broadcast %c0_i32_29 : i32 to vector<32x1xi32>
    %105 = arith.cmpi sge, %98, %104 : vector<32x1xi32>
    %106 = arith.andi %103, %105 : vector<32x1xi1>
    %c15_i32_30 = arith.constant 15 : i32
    %107 = vector.broadcast %c15_i32_30 : i32 to vector<32x1xi32>
    %108 = arith.cmpi sle, %98, %107 : vector<32x1xi32>
    %109 = arith.andi %106, %108 : vector<32x1xi1>
    %c32_i32_31 = arith.constant 32 : i32
    %110 = vector.broadcast %c32_i32_31 : i32 to vector<32x1xi32>
    %111 = arith.muli %58, %110 : vector<32x1xi32>
    %c2_i32_32 = arith.constant 2 : i32
    %112 = vector.broadcast %c2_i32_32 : i32 to vector<32x1xi32>
    %113 = arith.muli %98, %112 : vector<32x1xi32>
    %114 = arith.addi %111, %113 : vector<32x1xi32>
    %115 = arith.addi %114, %96 : vector<32x1xi32>
    %116 = vector.broadcast %115 : vector<32x1xi32> to vector<32x64xi32>
    %117 = arith.cmpi eq, %59, %116 : vector<32x64xi32>
    %118 = vector.broadcast %109 : vector<32x1xi1> to vector<32x64xi1>
    %119 = arith.andi %117, %118 : vector<32x64xi1>
    %cst_33 = arith.constant 0.000000e+00 : f32
    %120 = vector.shape_cast %62 : vector<32x1xf32> to vector<32x1xf32>
    %121 = vector.broadcast %120 : vector<32x1xf32> to vector<32x64xf32>
    %122 = vector.broadcast %cst_33 : f32 to vector<32x64xf32>
    %123 = arith.select %119, %121, %122 : vector<32x64xi1>, vector<32x64xf32>
    %124 = arith.addf %94, %123 : vector<32x64xf32>
    %c0_i32_34 = arith.constant 0 : i32
    %125 = vector.broadcast %c0_i32_34 : i32 to vector<32x1xi32>
    %126 = arith.addi %54, %125 : vector<32x1xi32>
    %c1_i32_35 = arith.constant 1 : i32
    %127 = vector.broadcast %c1_i32_35 : i32 to vector<32x1xi32>
    %128 = arith.addi %55, %127 : vector<32x1xi32>
    %c0_i32_36 = arith.constant 0 : i32
    %129 = vector.broadcast %c0_i32_36 : i32 to vector<32x1xi32>
    %130 = arith.cmpi sge, %126, %129 : vector<32x1xi32>
    %c1_i32_37 = arith.constant 1 : i32
    %131 = vector.broadcast %c1_i32_37 : i32 to vector<32x1xi32>
    %132 = arith.cmpi sle, %126, %131 : vector<32x1xi32>
    %133 = arith.andi %130, %132 : vector<32x1xi1>
    %c0_i32_38 = arith.constant 0 : i32
    %134 = vector.broadcast %c0_i32_38 : i32 to vector<32x1xi32>
    %135 = arith.cmpi sge, %128, %134 : vector<32x1xi32>
    %136 = arith.andi %133, %135 : vector<32x1xi1>
    %c15_i32_39 = arith.constant 15 : i32
    %137 = vector.broadcast %c15_i32_39 : i32 to vector<32x1xi32>
    %138 = arith.cmpi sle, %128, %137 : vector<32x1xi32>
    %139 = arith.andi %136, %138 : vector<32x1xi1>
    %c32_i32_40 = arith.constant 32 : i32
    %140 = vector.broadcast %c32_i32_40 : i32 to vector<32x1xi32>
    %141 = arith.muli %58, %140 : vector<32x1xi32>
    %c2_i32_41 = arith.constant 2 : i32
    %142 = vector.broadcast %c2_i32_41 : i32 to vector<32x1xi32>
    %143 = arith.muli %128, %142 : vector<32x1xi32>
    %144 = arith.addi %141, %143 : vector<32x1xi32>
    %145 = arith.addi %144, %126 : vector<32x1xi32>
    %146 = vector.broadcast %145 : vector<32x1xi32> to vector<32x64xi32>
    %147 = arith.cmpi eq, %59, %146 : vector<32x64xi32>
    %148 = vector.broadcast %139 : vector<32x1xi1> to vector<32x64xi1>
    %149 = arith.andi %147, %148 : vector<32x64xi1>
    %cst_42 = arith.constant 0.000000e+00 : f32
    %150 = vector.shape_cast %63 : vector<32x1xf32> to vector<32x1xf32>
    %151 = vector.broadcast %150 : vector<32x1xf32> to vector<32x64xf32>
    %152 = vector.broadcast %cst_42 : f32 to vector<32x64xf32>
    %153 = arith.select %149, %151, %152 : vector<32x64xi1>, vector<32x64xf32>
    %154 = arith.addf %124, %153 : vector<32x64xf32>
    %c1_i32_43 = arith.constant 1 : i32
    %155 = vector.broadcast %c1_i32_43 : i32 to vector<32x1xi32>
    %156 = arith.addi %54, %155 : vector<32x1xi32>
    %c1_i32_44 = arith.constant 1 : i32
    %157 = vector.broadcast %c1_i32_44 : i32 to vector<32x1xi32>
    %158 = arith.addi %55, %157 : vector<32x1xi32>
    %c0_i32_45 = arith.constant 0 : i32
    %159 = vector.broadcast %c0_i32_45 : i32 to vector<32x1xi32>
    %160 = arith.cmpi sge, %156, %159 : vector<32x1xi32>
    %c1_i32_46 = arith.constant 1 : i32
    %161 = vector.broadcast %c1_i32_46 : i32 to vector<32x1xi32>
    %162 = arith.cmpi sle, %156, %161 : vector<32x1xi32>
    %163 = arith.andi %160, %162 : vector<32x1xi1>
    %c0_i32_47 = arith.constant 0 : i32
    %164 = vector.broadcast %c0_i32_47 : i32 to vector<32x1xi32>
    %165 = arith.cmpi sge, %158, %164 : vector<32x1xi32>
    %166 = arith.andi %163, %165 : vector<32x1xi1>
    %c15_i32_48 = arith.constant 15 : i32
    %167 = vector.broadcast %c15_i32_48 : i32 to vector<32x1xi32>
    %168 = arith.cmpi sle, %158, %167 : vector<32x1xi32>
    %169 = arith.andi %166, %168 : vector<32x1xi1>
    %c32_i32_49 = arith.constant 32 : i32
    %170 = vector.broadcast %c32_i32_49 : i32 to vector<32x1xi32>
    %171 = arith.muli %58, %170 : vector<32x1xi32>
    %c2_i32_50 = arith.constant 2 : i32
    %172 = vector.broadcast %c2_i32_50 : i32 to vector<32x1xi32>
    %173 = arith.muli %158, %172 : vector<32x1xi32>
    %174 = arith.addi %171, %173 : vector<32x1xi32>
    %175 = arith.addi %174, %156 : vector<32x1xi32>
    %176 = vector.broadcast %175 : vector<32x1xi32> to vector<32x64xi32>
    %177 = arith.cmpi eq, %59, %176 : vector<32x64xi32>
    %178 = vector.broadcast %169 : vector<32x1xi1> to vector<32x64xi1>
    %179 = arith.andi %177, %178 : vector<32x64xi1>
    %cst_51 = arith.constant 0.000000e+00 : f32
    %180 = vector.shape_cast %64 : vector<32x1xf32> to vector<32x1xf32>
    %181 = vector.broadcast %180 : vector<32x1xf32> to vector<32x64xf32>
    %182 = vector.broadcast %cst_51 : f32 to vector<32x64xf32>
    %183 = arith.select %179, %181, %182 : vector<32x64xi1>, vector<32x64xf32>
    %184 = arith.addf %154, %183 : vector<32x64xf32>
    %cst_52 = arith.constant dense<0.000000e+00> : vector<32x2xf32>
    %185 = tpu.matmul %184, %9, %cst_52 {dimension_numbers = #tpu.dot_dimension_numbers<[1], [0], [0], [1], [0, 0, 1, 1], [], []>} : vector<32x64xf32>, vector<64x2xf32>, vector<32x2xf32> -> vector<32x2xf32>
    %cst_53 = arith.constant dense<0.000000e+00> : vector<32x4xf32>
    %186 = tpu.matmul %185, %5, %cst_53 {dimension_numbers = #tpu.dot_dimension_numbers<[1], [0], [0], [1], [0, 0, 1, 1], [], []>} : vector<32x2xf32>, vector<2x4xf32>, vector<32x4xf32> -> vector<32x4xf32>
    %187 = vector.broadcast %6 : vector<1x4xf32> to vector<32x4xf32>
    %188 = arith.addf %186, %187 : vector<32x4xf32>
    %189 = vector.extract_strided_slice %188 {offsets = [0, 0], sizes = [32, 2], strides = [1, 1]} : vector<32x4xf32> to vector<32x2xf32>
    "tpu.trace_start"() <{level = 10 : i32, message = "mc,nc->mn"}> : () -> ()
    %cst_54 = arith.constant dense<0.000000e+00> : vector<64x32xf32>
    %190 = tpu.matmul %12, %189, %cst_54 {dimension_numbers = #tpu.dot_dimension_numbers<[1], [1], [0], [0], [0, 0, 1, 0], [], []>} : vector<64x2xf32>, vector<32x2xf32>, vector<64x32xf32> -> vector<64x32xf32>
    "tpu.trace_stop"() : () -> ()
    %191 = tpu.iota {dimensions = array<i32: 0>} : vector<64x32xi32>
    %c5_i32 = arith.constant 5 : i32
    %192 = vector.broadcast %c5_i32 : i32 to vector<64x32xi32>
    %193 = arith.shrsi %191, %192 : vector<64x32xi32>
    %194 = tpu.iota {dimensions = array<i32: 1>} : vector<64x32xi32>
    %c4_i32_55 = arith.constant 4 : i32
    %195 = vector.broadcast %c4_i32_55 : i32 to vector<64x32xi32>
    %196 = arith.shrsi %194, %195 : vector<64x32xi32>
    %197 = arith.cmpi eq, %193, %196 : vector<64x32xi32>
    %cst_56 = arith.constant -1.000000e+30 : f32
    %198 = vector.broadcast %cst_56 : f32 to vector<64x32xf32>
    %199 = arith.select %197, %190, %198 : vector<64x32xi1>, vector<64x32xf32>
    %cst_57 = arith.constant dense<0xFF800000> : vector<64xf32>
    %200 = vector.multi_reduction <maximumf>, %199, %cst_57 [1] : vector<64x32xf32> to vector<64xf32>
    %201 = vector.shape_cast %200 : vector<64xf32> to vector<64x1xf32>
    %202 = vector.broadcast %201 : vector<64x1xf32> to vector<64x32xf32>
    %203 = arith.subf %199, %202 : vector<64x32xf32>
    %204 = math.exp %203 : vector<64x32xf32>
    %cst_58 = arith.constant dense<0.000000e+00> : vector<64xf32>
    %205 = vector.multi_reduction <add>, %204, %cst_58 [1] : vector<64x32xf32> to vector<64xf32>
    %206 = vector.shape_cast %205 : vector<64xf32> to vector<64x1xf32>
    %207 = tpu.reciprocal %206 {approx = true} : vector<64x1xf32> -> vector<64x1xf32>
    %208 = vector.broadcast %207 : vector<64x1xf32> to vector<64x32xf32>
    %209 = arith.mulf %204, %208 : vector<64x32xf32>
    %210 = vector.extract_strided_slice %188 {offsets = [0, 2], sizes = [32, 2], strides = [1, 1]} : vector<32x4xf32> to vector<32x2xf32>
    %cst_59 = arith.constant dense<0.000000e+00> : vector<64x2xf32>
    %211 = tpu.matmul %209, %210, %cst_59 {dimension_numbers = #tpu.dot_dimension_numbers<[1], [0], [0], [1], [0, 0, 1, 1], [], []>} : vector<64x32xf32>, vector<32x2xf32>, vector<64x2xf32> -> vector<64x2xf32>
    %cst_60 = arith.constant dense<0.000000e+00> : vector<64x2xf32>
    %212 = tpu.matmul %211, %7, %cst_60 {dimension_numbers = #tpu.dot_dimension_numbers<[1], [0], [0], [1], [0, 0, 1, 1], [], []>} : vector<64x2xf32>, vector<2x2xf32>, vector<64x2xf32> -> vector<64x2xf32>
    %213 = vector.broadcast %8 : vector<1x2xf32> to vector<64x2xf32>
    %214 = arith.addf %212, %213 : vector<64x2xf32>
    %215 = vector.extract_strided_slice %214 {offsets = [0, 0], sizes = [32, 2], strides = [1, 1]} : vector<64x2xf32> to vector<32x2xf32>
    %216 = vector.extract_strided_slice %35 {offsets = [0, 0], sizes = [16, 2], strides = [1, 1]} : vector<32x2xf32> to vector<16x2xf32>
    %217 = vector.extract_strided_slice %214 {offsets = [32, 0], sizes = [32, 2], strides = [1, 1]} : vector<64x2xf32> to vector<32x2xf32>
    %218 = vector.extract_strided_slice %35 {offsets = [16, 0], sizes = [16, 2], strides = [1, 1]} : vector<32x2xf32> to vector<16x2xf32>
    %219 = tpu.concatenate %215, %216, %217, %218 in 0 : vector<32x2xf32>, vector<16x2xf32>, vector<32x2xf32>, vector<16x2xf32> -> vector<96x2xf32>
    %220 = tpu.iota {dimensions = array<i32: 0>} : vector<2x128xi32>
    %221 = tpu.iota {dimensions = array<i32: 1>} : vector<2x128xi32>
    %222 = arith.cmpi eq, %220, %221 : vector<2x128xi32>
    %223 = arith.extui %222 : vector<2x128xi1> to vector<2x128xi32>
    %224 = arith.sitofp %223 : vector<2x128xi32> to vector<2x128xf32>
    %cst_61 = arith.constant dense<0.000000e+00> : vector<96x128xf32>
    %225 = tpu.matmul %219, %224, %cst_61 {dimension_numbers = #tpu.dot_dimension_numbers<[1], [0], [0], [1], [0, 0, 1, 1], [], []>} : vector<96x2xf32>, vector<2x128xf32>, vector<96x128xf32> -> vector<96x128xf32>
    %c0_62 = arith.constant 0 : index
    %c0_63 = arith.constant 0 : index
    %226 = vector.load %arg3[%c0_62, %c0_63] : memref<96x128xf32, #tpu.memory_space<vmem>>, vector<96x128xf32>
    tpu.vector_store %arg3[%c0_62, %c0_63], %225 {strides = array<i32>} : memref<96x128xf32, #tpu.memory_space<vmem>>, vector<96x128xf32>,
    return
  }
  func.func @transform_0(%arg0: i32) -> (i32, i32) {
    %c0_i32 = arith.constant 0 : i32
    %c0_i32_0 = arith.constant 0 : i32
    %c0_i32_1 = arith.constant 0 : i32
    return %c0_i32, %c0_i32_0 : i32, i32
  }
  func.func @transform_1(%arg0: i32) -> (i32, i32) {
    %c0_i32 = arith.constant 0 : i32
    %c0_i32_0 = arith.constant 0 : i32
    %c0_i32_1 = arith.constant 0 : i32
    return %c0_i32, %c0_i32_0 : i32, i32
  }
  func.func @transform_2(%arg0: i32) -> (i32, i32) {
    %c0_i32 = arith.constant 0 : i32
    %c0_i32_0 = arith.constant 0 : i32
    %c0_i32_1 = arith.constant 0 : i32
    return %c0_i32, %c0_i32_0 : i32, i32
  }
}

</mosaic_0001>

<llo_original>
// kernel: tile.13
$region0: #{tile.13}
  #allocation0 [shape = 's32[1]{0}', space=sflag, size = 0x4, scoped, tag = 'scoped memory for tile.13']
  %s0 = inlined_call_operand.vmem [shape: f32[2], index: 0, kind: input, shape index: {}]
  %s1 = inlined_call_operand.vmem [shape: f32[32,2], index: 1, kind: output, shape index: {}]
  // Predicated region
  $region2: #{tile.13} parent=0 // pred_check
    _
  $region3: #{tile.13} parent=0 // pred_check_branch
    %3 = sbr.rel (0) target = $region5
  $region4: #{tile.13} parent=0 // pred_region
    _
  $region5: #{tile.13} parent=0 // pred_fallthru
    _
  %v4 = vld [vmem:[%s0] ss:$0 sm:$0xff]
  %5 = vst [vmem:[%s1] sm:$0xff] %v4
  %s6 = scalar_lea.vmem %s1, 8
  %7 = vst [vmem:[%s6] sm:$0xff] %v4
  %s8 = scalar_lea.vmem %s1, 16
  %9 = vst [vmem:[%s8] sm:$0xff] %v4
  %s10 = scalar_lea.vmem %s1, 24
  %11 = vst [vmem:[%s10] sm:$0xff] %v4

// kernel: tile.18
$region0: #{tile.18}
  #allocation0 [shape = 's32[1]{0}', space=sflag, size = 0x4, scoped, tag = 'scoped memory for tile.18']
  %s0 = inlined_call_operand.vmem [shape: f32[16], index: 0, kind: input, shape index: {}]
  %s1 = inlined_call_operand.vmem [shape: f32[2,16], index: 1, kind: output, shape index: {}]
  // Predicated region
  $region2: #{tile.18} parent=0 // pred_check
    _
  $region3: #{tile.18} parent=0 // pred_check_branch
    %3 = sbr.rel (0) target = $region5
  $region4: #{tile.18} parent=0 // pred_region
    _
  $region5: #{tile.18} parent=0 // pred_fallthru
    _
  %v4 = vld [vmem:[%s0] ss:$0 sm:$0xff]
  %5 = vst [vmem:[%s1] sm:$0x3] %v4

// kernel: swin_deformable_attention.1
$region0: #{swin_deformable_attention.1}
  #allocation0 [shape = 'u32[]', space=smem, size = 0x4, offset = 0x4, fixed_abs, tag = 'smem constant byte address 0x4 - core index']
  #allocation1 [shape = 'u32[144,128]{1,0:T(1,128)}', space=vmem, size = 0x12000, scoped, tag = 'internal scratch']
  %s0 = inlined_call_operand.vmem [shape: f32[64,2], index: 0, kind: input, shape index: {}]
  %s1 = inlined_call_operand.vmem [shape: f32[168,128], index: 1, kind: input, shape index: {}]
  %s2 = inlined_call_operand.vmem [shape: f32[96,128], index: 2, kind: output, shape index: {}]
  %s3 = sld [smem:[#allocation0]]
  $region18: #{swin_deformable_attention.1} parent=0
    _
  %s5 = ssub.s32 1, %s3
  %s6 = scalar_select 0, %s5, %s3
  // Predicated region
  $region2: #{swin_deformable_attention.1} parent=0 // pred_check
    _
  $region3: #{swin_deformable_attention.1} parent=0 // pred_check_branch
    %8 = sbr.rel (0) target = $region5
  $region4: #{swin_deformable_attention.1} parent=0 // pred_region
    _
  $region5: #{swin_deformable_attention.1} parent=0 // pred_fallthru
    _
  // Predicated region
  $region6: #{swin_deformable_attention.1} parent=0 // pred_check
    _
  $region7: #{swin_deformable_attention.1} parent=0 // pred_check_branch
    %10 = sbr.rel (0) target = $region9
  $region8: #{swin_deformable_attention.1} parent=0 // pred_region
    _
  $region9: #{swin_deformable_attention.1} parent=0 // pred_fallthru
    _
  %v11 = vld [vmem:[%s1] sm:$0xff]
  %v12 = vld [vmem:[%s1 + $0x8] sm:$0xff]
  %v13 = vld [vmem:[%s1 + $0x10] sm:$0xff]
  %v14 = vld [vmem:[%s1 + $0x18] sm:$0xff]
  %v15 = vld [vmem:[%s1 + $0x20] sm:$0xff]
  %v16 = vld [vmem:[%s1 + $0x28] sm:$0xff]
  %v17 = vld [vmem:[%s1 + $0x30] sm:$0xff]
  %v18 = vld [vmem:[%s1 + $0x38] sm:$0xff]
  %v19 = vld [vmem:[%s1 + $0x40] sm:$0xff]
  %v20 = vld [vmem:[%s1 + $0x48] sm:$0xff]
  %v21 = vld [vmem:[%s1 + $0x50] sm:$0xff]
  %v22 = vld [vmem:[%s1 + $0x58] sm:$0xff]
  %v23 = vld [vmem:[%s1 + $0x60] sm:$0xff]
  %v24 = vld [vmem:[%s1 + $0x68] sm:$0xff]
  %v25 = vld [vmem:[%s1 + $0x70] sm:$0xff]
  %v26 = vld [vmem:[%s1 + $0x78] sm:$0xff]
  %v27 = vld [vmem:[%s1 + $0x80] sm:$0xff]
  %v28 = vld [vmem:[%s1 + $0x88] sm:$0xff]
  %v29 = vld [vmem:[%s1 + $0x90] sm:$0xff]
  %v30 = vld [vmem:[%s1 + $0x98] sm:$0xff]
  %v31 = vld [vmem:[%s1 + $0xa0] sm:$0xff]
  %v32 = vld [vmem:[%s0] sm:$0xff]
  %v33 = vld [vmem:[%s0 + $0x8] sm:$0xff]
  %v34 = vld [vmem:[%s0 + $0x10] sm:$0xff]
  %v35 = vld [vmem:[%s0 + $0x18] sm:$0xff]
  %v36 = vld [vmem:[%s0 + $0x20] sm:$0xff]
  %v37 = vld [vmem:[%s0 + $0x28] sm:$0xff]
  %v38 = vld [vmem:[%s0 + $0x30] sm:$0xff]
  %v39 = vld [vmem:[%s0 + $0x38] sm:$0xff]
  %41 = vset.pattern.permute.xlu0 64
  %42 = vperm.xlu0 %41, %v11
  %v43 = vpop.permute.xlu0 %42
  %46 = vset.pattern.permute.xlu0 64
  %47 = vperm.xlu0 %46, %v12
  %v48 = vpop.permute.xlu0 %47
  %51 = vset.pattern.permute.xlu0 64
  %52 = vperm.xlu0 %51, %v13
  %v53 = vpop.permute.xlu0 %52
  %56 = vset.pattern.permute.xlu0 64
  %57 = vperm.xlu0 %56, %v14
  %v58 = vpop.permute.xlu0 %57
  %61 = vset.pattern.permute.xlu0 64
  %62 = vperm.xlu0 %61, %v15
  %v63 = vpop.permute.xlu0 %62
  %66 = vset.pattern.permute.xlu0 64
  %67 = vperm.xlu0 %66, %v16
  %v68 = vpop.permute.xlu0 %67
  %71 = vset.pattern.permute.xlu0 64
  %72 = vperm.xlu0 %71, %v17
  %v73 = vpop.permute.xlu0 %72
  %76 = vset.pattern.permute.xlu0 64
  %77 = vperm.xlu0 %76, %v18
  %v78 = vpop.permute.xlu0 %77
  %vm80 = vcmask 523264
  %v81 = vsel %vm80, %v11, 0
  %v83 = vsel %vm80, %v12, 0
  %v85 = vsel %vm80, %v13, 0
  %v87 = vsel %vm80, %v14, 0
  %v89 = vsel %vm80, %v15, 0
  %v91 = vsel %vm80, %v16, 0
  %v93 = vsel %vm80, %v17, 0
  %v95 = vsel %vm80, %v18, 0
  %97 = vmatprep.subr.mxu0 0.0
  %98 = vmatpush1.msra.mxu0 %v32
  %99 = vmatprep.subr.mxu0 0.0
  %100 = vmatpush1.msra.mxu0 %v33
  %101 = vmatprep.subr.mxu0 0.0
  %102 = vmatpush1.msra.mxu0 %v34
  %103 = vmatprep.subr.mxu0 0.0
  %104 = vmatpush1.msra.mxu0 %v35
  %105 = vmatprep.subr.mxu0 0.0
  %106 = vmatpush1.msra.mxu0 %v36
  %107 = vmatprep.subr.mxu0 0.0
  %108 = vmatpush1.msra.mxu0 %v37
  %109 = vmatprep.subr.mxu0 0.0
  %110 = vmatpush1.msra.mxu0 %v38
  %111 = vmatprep.subr.mxu0 0.0
  %112 = vmatpush1.msra.mxu0 %v39
  %113 = vmatprep.subr.mxu0 0.0
  %114 = vmatpush1.msra.mxu0 0.0
  %115 = vmatprep.subr.mxu0 0.0
  %116 = vmatpush1.msra.mxu0 0.0
  %117 = vmatprep.subr.mxu0 0.0
  %118 = vmatpush1.msra.mxu0 0.0
  %119 = vmatprep.subr.mxu0 0.0
  %120 = vmatpush1.msra.mxu0 0.0
  %121 = vmatprep.subr.mxu0 0.0
  %122 = vmatpush1.msra.mxu0 0.0
  %123 = vmatprep.subr.mxu0 0.0
  %124 = vmatpush1.msra.mxu0 0.0
  %125 = vmatprep.subr.mxu0 0.0
  %126 = vmatpush1.msra.mxu0 0.0
  %127 = vmatprep.subr.mxu0 0.0
  %128 = vmatpush1.msra.mxu0 0.0
  %129 = vmatprep.subr.mxu0 0.0
  %130 = vmatpush1.msra.mxu0 0.0
  %131 = vmatprep.subr.mxu0 0.0
  %132 = vmatpush1.msra.mxu0 0.0
  %133 = vmatprep.subr.mxu0 0.0
  %134 = vmatpush1.msra.mxu0 0.0
  %135 = vmatprep.subr.mxu0 0.0
  %136 = vmatpush1.msra.mxu0 0.0
  %137 = vmatprep.subr.mxu0 0.0
  %138 = vmatpush1.msra.mxu0 0.0
  %139 = vmatprep.subr.mxu0 0.0
  %140 = vmatpush1.msra.mxu0 0.0
  %141 = vmatprep.subr.mxu0 0.0
  %142 = vmatpush1.msra.mxu0 0.0
  %143 = vmatprep.subr.mxu0 0.0
  %144 = vmatpush1.msra.mxu0 0.0
  %145 = vmatprep.subr.mxu0 0.0
  %146 = vmatpush1.msra.mxu0 0.0
  %147 = vmatprep.subr.mxu0 0.0
  %148 = vmatpush1.msra.mxu0 0.0
  %149 = vmatprep.subr.mxu0 0.0
  %150 = vmatpush1.msra.mxu0 0.0
  %151 = vmatprep.subr.mxu0 0.0
  %152 = vmatpush1.msra.mxu0 0.0
  %153 = vmatprep.subr.mxu0 0.0
  %154 = vmatpush1.msra.mxu0 0.0
  %155 = vmatprep.subr.mxu0 0.0
  %156 = vmatpush1.msra.mxu0 0.0
  %157 = vmatprep.subr.mxu0 0.0
  %158 = vmatpush1.msra.mxu0 0.0
  %159 = vmatprep.subr.mxu0 0.0
  %160 = vmatpush1.msra.mxu0 0.0
  %161 = vmatprep.mubr.f32.mxu0 0.0
  %162 = vmatmul.mubr.f32.gmra.mrb[0].mxu0 %v81
  %v163 = vpop.f32.mrb[0].mxu0
  %v164 = vadd.f32 %v43, %v163
  %v165 = vpop.f32.mrb[0].mxu0
  %166 = vmatprep.mubr.f32.mxu0 0.0
  %167 = vmatmul.mubr.f32.gmra.mrb[0].mxu0 %v83
  %v168 = vpop.f32.mrb[0].mxu0
  %v169 = vadd.f32 %v48, %v168
  %v170 = vpop.f32.mrb[0].mxu0
  %171 = vmatprep.mubr.f32.mxu0 0.0
  %172 = vmatmul.mubr.f32.gmra.mrb[0].mxu0 %v85
  %v173 = vpop.f32.mrb[0].mxu0
  %v174 = vadd.f32 %v53, %v173
  %v175 = vpop.f32.mrb[0].mxu0
  %176 = vmatprep.mubr.f32.mxu0 0.0
  %177 = vmatmul.mubr.f32.gmra.mrb[0].mxu0 %v87
  %v178 = vpop.f32.mrb[0].mxu0
  %v179 = vadd.f32 %v58, %v178
  %v180 = vpop.f32.mrb[0].mxu0
  %181 = vmatprep.mubr.f32.mxu0 0.0
  %182 = vmatmul.mubr.f32.gmra.mrb[0].mxu0 %v89
  %v183 = vpop.f32.mrb[0].mxu0
  %v184 = vadd.f32 %v63, %v183
  %v185 = vpop.f32.mrb[0].mxu0
  %186 = vmatprep.mubr.f32.mxu0 0.0
  %187 = vmatmul.mubr.f32.gmra.mrb[0].mxu0 %v91
  %v188 = vpop.f32.mrb[0].mxu0
  %v189 = vadd.f32 %v68, %v188
  %v190 = vpop.f32.mrb[0].mxu0
  %191 = vmatprep.mubr.f32.mxu0 0.0
  %192 = vmatmul.mubr.f32.gmra.mrb[0].mxu0 %v93
  %v193 = vpop.f32.mrb[0].mxu0
  %v194 = vadd.f32 %v73, %v193
  %v195 = vpop.f32.mrb[0].mxu0
  %196 = vmatprep.mubr.f32.mxu0 0.0
  %197 = vmatmul.mubr.f32.gmra.mrb[0].mxu0 %v95
  %v198 = vpop.f32.mrb[0].mxu0
  %v199 = vadd.f32 %v78, %v198
  %v200 = vpop.f32.mrb[0].mxu0
  %201 = vdwg.mxu0
  %v203 = vsel %vm80, %v19, 0
  %v206 = vsel %vm80, %v20, 0
  %v209 = vsel %vm80, %v21, 0
  %v212 = vsel %vm80, %v22, 0
  %v215 = vsel %vm80, %v23, 0
  %v218 = vsel %vm80, %v24, 0
  %v221 = vsel %vm80, %v25, 0
  %v224 = vsel %vm80, %v26, 0
  %v227 = vsel %vm80, %v27, 0
  %v230 = vsel %vm80, %v28, 0
  %v233 = vsel %vm80, %v29, 0
  %v236 = vsel %vm80, %v30, 0
  %238 = vmatprep.subr.mxu0 0.0
  %239 = vmatpush1.msra.mxu0 %v164
  %240 = vmatprep.subr.mxu0 0.0
  %241 = vmatpush1.msra.mxu0 %v169
  %242 = vmatprep.subr.mxu0 0.0
  %243 = vmatpush1.msra.mxu0 %v174
  %244 = vmatprep.subr.mxu0 0.0
  %245 = vmatpush1.msra.mxu0 %v179
  %246 = vmatprep.subr.mxu0 0.0
  %247 = vmatpush1.msra.mxu0 %v184
  %248 = vmatprep.subr.mxu0 0.0
  %249 = vmatpush1.msra.mxu0 %v189
  %250 = vmatprep.subr.mxu0 0.0
  %251 = vmatpush1.msra.mxu0 %v194
  %252 = vmatprep.subr.mxu0 0.0
  %253 = vmatpush1.msra.mxu0 %v199
  %254 = vmatprep.subr.mxu0 0.0
  %255 = vmatpush1.msra.mxu0 0.0
  %256 = vmatprep.subr.mxu0 0.0
  %257 = vmatpush1.msra.mxu0 0.0
  %258 = vmatprep.subr.mxu0 0.0
  %259 = vmatpush1.msra.mxu0 0.0
  %260 = vmatprep.subr.mxu0 0.0
  %261 = vmatpush1.msra.mxu0 0.0
  %262 = vmatprep.subr.mxu0 0.0
  %263 = vmatpush1.msra.mxu0 0.0
  %264 = vmatprep.subr.mxu0 0.0
  %265 = vmatpush1.msra.mxu0 0.0
  %266 = vmatprep.subr.mxu0 0.0
  %267 = vmatpush1.msra.mxu0 0.0
  %268 = vmatprep.subr.mxu0 0.0
  %269 = vmatpush1.msra.mxu0 0.0
  %270 = vmatprep.subr.mxu0 0.0
  %271 = vmatpush1.msra.mxu0 0.0
  %272 = vmatprep.subr.mxu0 0.0
  %273 = vmatpush1.msra.mxu0 0.0
  %274 = vmatprep.subr.mxu0 0.0
  %275 = vmatpush1.msra.mxu0 0.0
  %276 = vmatprep.subr.mxu0 0.0
  %277 = vmatpush1.msra.mxu0 0.0
  %278 = vmatprep.subr.mxu0 0.0
  %279 = vmatpush1.msra.mxu0 0.0
  %280 = vmatprep.subr.mxu0 0.0
  %281 = vmatpush1.msra.mxu0 0.0
  %282 = vmatprep.subr.mxu0 0.0
  %283 = vmatpush1.msra.mxu0 0.0
  %284 = vmatprep.subr.mxu0 0.0
  %285 = vmatpush1.msra.mxu0 0.0
  %286 = vmatprep.subr.mxu0 0.0
  %287 = vmatpush1.msra.mxu0 0.0
  %288 = vmatprep.subr.mxu0 0.0
  %289 = vmatpush1.msra.mxu0 0.0
  %290 = vmatprep.subr.mxu0 0.0
  %291 = vmatpush1.msra.mxu0 0.0
  %292 = vmatprep.subr.mxu0 0.0
  %293 = vmatpush1.msra.mxu0 0.0
  %294 = vmatprep.subr.mxu0 0.0
  %295 = vmatpush1.msra.mxu0 0.0
  %296 = vmatprep.subr.mxu0 0.0
  %297 = vmatpush1.msra.mxu0 0.0
  %298 = vmatprep.subr.mxu0 0.0
  %299 = vmatpush1.msra.mxu0 0.0
  %300 = vmatprep.subr.mxu0 0.0
  %301 = vmatpush1.msra.mxu0 0.0
  %302 = vmatprep.mubr.f32.mxu0 0.0
  %303 = vmatmul.mubr.f32.gmra.mrb[0].mxu0 %v203
  %v304 = vpop.f32.mrb[0].mxu0
  %v305 = vadd.f32 0.0, %v304
  %v306 = vpop.f32.mrb[0].mxu0
  %307 = vmatprep.mubr.f32.mxu0 0.0
  %308 = vmatmul.mubr.f32.gmra.mrb[0].mxu0 %v206
  %v309 = vpop.f32.mrb[0].mxu0
  %v310 = vadd.f32 0.0, %v309
  %v311 = vpop.f32.mrb[0].mxu0
  %312 = vmatprep.mubr.f32.mxu0 0.0
  %313 = vmatmul.mubr.f32.gmra.mrb[0].mxu0 %v209
  %v314 = vpop.f32.mrb[0].mxu0
  %v315 = vadd.f32 0.0, %v314
  %v316 = vpop.f32.mrb[0].mxu0
  %317 = vmatprep.mubr.f32.mxu0 0.0
  %318 = vmatmul.mubr.f32.gmra.mrb[0].mxu0 %v212
  %v319 = vpop.f32.mrb[0].mxu0
  %v320 = vadd.f32 0.0, %v319
  %v321 = vpop.f32.mrb[0].mxu0
  %322 = vmatprep.mubr.f32.mxu0 0.0
  %323 = vmatmul.mubr.f32.gmra.mrb[0].mxu0 %v215
  %v324 = vpop.f32.mrb[0].mxu0
  %v325 = vadd.f32 0.0, %v324
  %v326 = vpop.f32.mrb[0].mxu0
  %327 = vmatprep.mubr.f32.mxu0 0.0
  %328 = vmatmul.mubr.f32.gmra.mrb[0].mxu0 %v218
  %v329 = vpop.f32.mrb[0].mxu0
  %v330 = vadd.f32 0.0, %v329
  %v331 = vpop.f32.mrb[0].mxu0
  %332 = vmatprep.mubr.f32.mxu0 0.0
  %333 = vmatmul.mubr.f32.gmra.mrb[0].mxu0 %v221
  %v334 = vpop.f32.mrb[0].mxu0
  %v335 = vadd.f32 0.0, %v334
  %v336 = vpop.f32.mrb[0].mxu0
  %337 = vmatprep.mubr.f32.mxu0 0.0
  %338 = vmatmul.mubr.f32.gmra.mrb[0].mxu0 %v224
  %v339 = vpop.f32.mrb[0].mxu0
  %v340 = vadd.f32 0.0, %v339
  %v341 = vpop.f32.mrb[0].mxu0
  %342 = vmatprep.mubr.f32.mxu0 0.0
  %343 = vmatmul.mubr.f32.gmra.mrb[0].mxu0 %v227
  %v344 = vpop.f32.mrb[0].mxu0
  %v345 = vadd.f32 0.0, %v344
  %v346 = vpop.f32.mrb[0].mxu0
  %347 = vmatprep.mubr.f32.mxu0 0.0
  %348 = vmatmul.mubr.f32.gmra.mrb[0].mxu0 %v230
  %v349 = vpop.f32.mrb[0].mxu0
  %v350 = vadd.f32 0.0, %v349
  %v351 = vpop.f32.mrb[0].mxu0
  %352 = vmatprep.mubr.f32.mxu0 0.0
  %353 = vmatmul.mubr.f32.gmra.mrb[0].mxu0 %v233
  %v354 = vpop.f32.mrb[0].mxu0
  %v355 = vadd.f32 0.0, %v354
  %v356 = vpop.f32.mrb[0].mxu0
  %357 = vmatprep.mubr.f32.mxu0 0.0
  %358 = vmatmul.mubr.f32.gmra.mrb[0].mxu0 %v236
  %v359 = vpop.f32.mrb[0].mxu0
  %v360 = vadd.f32 0.0, %v359
  %v361 = vpop.f32.mrb[0].mxu0
  %362 = vdwg.mxu0
  %v363 = vlaneseq
  %v364 = vand.u32 %v363, 127
  %365 = vset.pattern.permute.xlu0 64
  %366 = vperm.xlu0 %365, %v19
  %v367 = vpop.permute.xlu0 %366
  %369 = vset.pattern.permute.xlu0 64
  %370 = vperm.xlu0 %369, %v20
  %v371 = vpop.permute.xlu0 %370
  %373 = vset.pattern.permute.xlu0 64
  %374 = vperm.xlu0 %373, %v21
  %v375 = vpop.permute.xlu0 %374
  %377 = vset.pattern.permute.xlu0 64
  %378 = vperm.xlu0 %377, %v22
  %v379 = vpop.permute.xlu0 %378
  %v381 = vadd.f32 %v367, %v325
  %v382 = vadd.f32 %v371, %v330
  %v383 = vadd.f32 %v375, %v335
  %v384 = vadd.f32 %v379, %v340
  %vm385 = vcmp.eq.s32.totalorder %v364, 1
  %387 = vset.pattern.permute.xlu0 0
  %388 = vperm.xlu0 %387, %v305
  %v389 = vpop.permute.xlu0 %388
  %392 = vset.pattern.permute.xlu0 0
  %393 = vperm.xlu0 %392, %v310
  %v394 = vpop.permute.xlu0 %393
  %397 = vset.pattern.permute.xlu0 0
  %398 = vperm.xlu0 %397, %v315
  %v399 = vpop.permute.xlu0 %398
  %402 = vset.pattern.permute.xlu0 0
  %403 = vperm.xlu0 %402, %v320
  %v404 = vpop.permute.xlu0 %403
  %v406 = vsel %vm385, %v389, 0.0
  %v407 = vsel %vm385, %v394, 0.0
  %v408 = vsel %vm385, %v399, 0.0
  %v409 = vsel %vm385, %v404, 0.0
  %v410 = vadd.f32 %v381, %v406
  %v411 = vadd.f32 %v382, %v407
  %v412 = vadd.f32 %v383, %v408
  %v413 = vadd.f32 %v384, %v409
  %vm414 = vcmp.eq.s32.totalorder %v364, 0
  %416 = vset.pattern.permute.xlu0 1
  %417 = vperm.xlu0 %416, %v345
  %v418 = vpop.permute.xlu0 %417
  %421 = vset.pattern.permute.xlu0 1
  %422 = vperm.xlu0 %421, %v350
  %v423 = vpop.permute.xlu0 %422
  %426 = vset.pattern.permute.xlu0 1
  %427 = vperm.xlu0 %426, %v355
  %v428 = vpop.permute.xlu0 %427
  %431 = vset.pattern.permute.xlu0 1
  %432 = vperm.xlu0 %431, %v360
  %v433 = vpop.permute.xlu0 %432
  %v435 = vsel %vm414, %v418, 0.0
  %v436 = vsel %vm414, %v423, 0.0
  %v437 = vsel %vm414, %v428, 0.0
  %v438 = vsel %vm414, %v433, 0.0
  %v439 = vadd.f32 %v410, %v435
  %v440 = vadd.f32 %v411, %v436
  %v441 = vadd.f32 %v412, %v437
  %v442 = vadd.f32 %v413, %v438
  %v443 = vadd.f32 %v439, 1.0
  %v444 = vadd.f32 %v440, 1.0
  %v445 = vadd.f32 %v441, 1.0
  %v446 = vadd.f32 %v442, 1.0
  %v447 = vmul.f32 %v443, 0.5
  %v448 = vmul.f32 %v444, 0.5
  %v449 = vmul.f32 %v445, 0.5
  %v450 = vmul.f32 %v446, 0.5
  %v451 = vmul.f32 %v443, 7.5
  %v452 = vmul.f32 %v444, 7.5
  %v453 = vmul.f32 %v445, 7.5
  %v454 = vmul.f32 %v446, 7.5
  %v455 = vfloor.f32 %v447
  %v456 = vfloor.f32 %v448
  %v457 = vfloor.f32 %v449
  %v458 = vfloor.f32 %v450
  %v459 = vfloor.f32 %v451
  %v460 = vfloor.f32 %v452
  %v461 = vfloor.f32 %v453
  %v462 = vfloor.f32 %v454
  %v463 = vsub.f32 %v447, %v455
  %v464 = vsub.f32 %v448, %v456
  %v465 = vsub.f32 %v449, %v457
  %v466 = vsub.f32 %v450, %v458
  %v467 = vsub.f32 1.0, %v463
  %v468 = vsub.f32 1.0, %v464
  %v469 = vsub.f32 1.0, %v465
  %v470 = vsub.f32 1.0, %v466
  %v471 = vsub.f32 %v451, %v459
  %v472 = vsub.f32 %v452, %v460
  %v473 = vsub.f32 %v453, %v461
  %v474 = vsub.f32 %v454, %v462
  %v475 = vsub.f32 1.0, %v471
  %v476 = vsub.f32 1.0, %v472
  %v477 = vsub.f32 1.0, %v473
  %v478 = vsub.f32 1.0, %v474
  %v479 = vcvt.f32.s32.to.zero.pseudo %v455
  %v480 = vcvt.f32.s32.to.zero.pseudo %v456
  %v481 = vcvt.f32.s32.to.zero.pseudo %v457
  %v482 = vcvt.f32.s32.to.zero.pseudo %v458
  %v483 = vcvt.f32.s32.to.zero.pseudo %v459
  %v484 = vcvt.f32.s32.to.zero.pseudo %v460
  %v485 = vcvt.f32.s32.to.zero.pseudo %v461
  %v486 = vcvt.f32.s32.to.zero.pseudo %v462
  %v487 = vlaneseq
  %v488 = vshrl.u32 %v487, 7
  %v489 = vadd.s32 %v488, 8
  %v490 = vadd.s32 %v488, 16
  %v491 = vadd.s32 %v488, 24
  %v492 = vshra.s32 %v488, 4
  %v493 = vshra.s32 %v489, 4
  %v494 = vshra.s32 %v490, 4
  %v495 = vshra.s32 %v491, 4
  %500 = vrot.lane.b32.xlu0 %v467, 127
  %v501 = vpop.permute.xlu0 %500
  %502 = vrot.lane.b32.xlu0 %v468, 127
  %v503 = vpop.permute.xlu0 %502
  %504 = vrot.lane.b32.xlu0 %v469, 127
  %v505 = vpop.permute.xlu0 %504
  %506 = vrot.lane.b32.xlu0 %v470, 127
  %v507 = vpop.permute.xlu0 %506
  %v512 = vmul.f32 %v475, %v501
  %v513 = vmul.f32 %v476, %v503
  %v514 = vmul.f32 %v477, %v505
  %v515 = vmul.f32 %v478, %v507
  %520 = vrot.lane.b32.xlu0 %v463, 127
  %v521 = vpop.permute.xlu0 %520
  %522 = vrot.lane.b32.xlu0 %v464, 127
  %v523 = vpop.permute.xlu0 %522
  %524 = vrot.lane.b32.xlu0 %v465, 127
  %v525 = vpop.permute.xlu0 %524
  %526 = vrot.lane.b32.xlu0 %v466, 127
  %v527 = vpop.permute.xlu0 %526
  %v532 = vmul.f32 %v475, %v521
  %v533 = vmul.f32 %v476, %v523
  %v534 = vmul.f32 %v477, %v525
  %v535 = vmul.f32 %v478, %v527
  %v536 = vmul.f32 %v471, %v501
  %v537 = vmul.f32 %v472, %v503
  %v538 = vmul.f32 %v473, %v505
  %v539 = vmul.f32 %v474, %v507
  %v540 = vmul.f32 %v471, %v521
  %v541 = vmul.f32 %v472, %v523
  %v542 = vmul.f32 %v473, %v525
  %v543 = vmul.f32 %v474, %v527
  %vm544 = vcmp.ge.s32.totalorder %v479, 0
  %vm545 = vcmp.ge.s32.totalorder %v480, 0
  %vm546 = vcmp.ge.s32.totalorder %v481, 0
  %vm547 = vcmp.ge.s32.totalorder %v482, 0
  %vm548 = vcmp.le.s32.totalorder %v479, 1
  %vm549 = vcmp.le.s32.totalorder %v480, 1
  %vm550 = vcmp.le.s32.totalorder %v481, 1
  %vm551 = vcmp.le.s32.totalorder %v482, 1
  %vm552 = vmand %vm544, %vm548
  %vm553 = vmand %vm545, %vm549
  %vm554 = vmand %vm546, %vm550
  %vm555 = vmand %vm547, %vm551
  %vm556 = vcmp.ge.s32.totalorder %v483, 0
  %vm557 = vcmp.ge.s32.totalorder %v484, 0
  %vm558 = vcmp.ge.s32.totalorder %v485, 0
  %vm559 = vcmp.ge.s32.totalorder %v486, 0
  %v560 = vsel %vm556, 1, 0
  %v561 = vsel %vm557, 1, 0
  %v562 = vsel %vm558, 1, 0
  %v563 = vsel %vm559, 1, 0
  %564 = vrot.lane.b32.xlu0 %v560, 1
  %v565 = vpop.permute.xlu0 %564
  %566 = vrot.lane.b32.xlu0 %v561, 1
  %v567 = vpop.permute.xlu0 %566
  %568 = vrot.lane.b32.xlu0 %v562, 1
  %v569 = vpop.permute.xlu0 %568
  %570 = vrot.lane.b32.xlu0 %v563, 1
  %v571 = vpop.permute.xlu0 %570
  %vm572 = vcmp.ne.s32.totalorder %v565, 0
  %vm573 = vcmp.ne.s32.totalorder %v567, 0
  %vm574 = vcmp.ne.s32.totalorder %v569, 0
  %vm575 = vcmp.ne.s32.totalorder %v571, 0
  %vm576 = vmand %vm552, %vm572
  %vm577 = vmand %vm553, %vm573
  %vm578 = vmand %vm554, %vm574
  %vm579 = vmand %vm555, %vm575
  %vm580 = vcmp.le.s32.totalorder %v483, 15
  %vm581 = vcmp.le.s32.totalorder %v484, 15
  %vm582 = vcmp.le.s32.totalorder %v485, 15
  %vm583 = vcmp.le.s32.totalorder %v486, 15
  %v584 = vsel %vm580, 1, 0
  %v585 = vsel %vm581, 1, 0
  %v586 = vsel %vm582, 1, 0
  %v587 = vsel %vm583, 1, 0
  %588 = vrot.lane.b32.xlu0 %v584, 1
  %v589 = vpop.permute.xlu0 %588
  %590 = vrot.lane.b32.xlu0 %v585, 1
  %v591 = vpop.permute.xlu0 %590
  %592 = vrot.lane.b32.xlu0 %v586, 1
  %v593 = vpop.permute.xlu0 %592
  %594 = vrot.lane.b32.xlu0 %v587, 1
  %v595 = vpop.permute.xlu0 %594
  %vm596 = vcmp.ne.s32.totalorder %v589, 0
  %vm597 = vcmp.ne.s32.totalorder %v591, 0
  %vm598 = vcmp.ne.s32.totalorder %v593, 0
  %vm599 = vcmp.ne.s32.totalorder %v595, 0
  %vm600 = vmand %vm576, %vm596
  %vm601 = vmand %vm577, %vm597
  %vm602 = vmand %vm578, %vm598
  %vm603 = vmand %vm579, %vm599
  %v604 = vmul.u32 %v492, 32
  %v605 = vmul.u32 %v493, 32
  %v606 = vmul.u32 %v494, 32
  %v607 = vmul.u32 %v495, 32
  %v608 = vmul.u32 %v483, 2
  %v609 = vmul.u32 %v484, 2
  %v610 = vmul.u32 %v485, 2
  %v611 = vmul.u32 %v486, 2
  %v612 = vadd.s32 %v604, %v608
  %v613 = vadd.s32 %v605, %v609
  %v614 = vadd.s32 %v606, %v610
  %v615 = vadd.s32 %v607, %v611
  %616 = vrot.lane.b32.xlu0 %v479, 127
  %v617 = vpop.permute.xlu0 %616
  %618 = vrot.lane.b32.xlu0 %v480, 127
  %v619 = vpop.permute.xlu0 %618
  %620 = vrot.lane.b32.xlu0 %v481, 127
  %v621 = vpop.permute.xlu0 %620
  %622 = vrot.lane.b32.xlu0 %v482, 127
  %v623 = vpop.permute.xlu0 %622
  %v624 = vadd.s32 %v612, %v617
  %v625 = vadd.s32 %v613, %v619
  %v626 = vadd.s32 %v614, %v621
  %v627 = vadd.s32 %v615, %v623
  %628 = vset.pattern.permute.xlu0 0
  %629 = vperm.xlu0 %628, %v624
  %v630 = vpop.permute.xlu0 %629
  %631 = vset.pattern.permute.xlu0 0
  %632 = vperm.xlu0 %631, %v625
  %v633 = vpop.permute.xlu0 %632
  %634 = vset.pattern.permute.xlu0 0
  %635 = vperm.xlu0 %634, %v626
  %v636 = vpop.permute.xlu0 %635
  %637 = vset.pattern.permute.xlu0 0
  %638 = vperm.xlu0 %637, %v627
  %v639 = vpop.permute.xlu0 %638
  %vm640 = vcmp.eq.s32.totalorder %v364, %v630
  %vm641 = vcmp.eq.s32.totalorder %v364, %v633
  %vm642 = vcmp.eq.s32.totalorder %v364, %v636
  %vm643 = vcmp.eq.s32.totalorder %v364, %v639
  %v644 = vsel %vm600, 1, 0
  %v645 = vsel %vm601, 1, 0
  %v646 = vsel %vm602, 1, 0
  %v647 = vsel %vm603, 1, 0
  %648 = vset.pattern.permute.xlu0 1
  %649 = vperm.xlu0 %648, %v644
  %v650 = vpop.permute.xlu0 %649
  %651 = vset.pattern.permute.xlu0 1
  %652 = vperm.xlu0 %651, %v645
  %v653 = vpop.permute.xlu0 %652
  %654 = vset.pattern.permute.xlu0 1
  %655 = vperm.xlu0 %654, %v646
  %v656 = vpop.permute.xlu0 %655
  %657 = vset.pattern.permute.xlu0 1
  %658 = vperm.xlu0 %657, %v647
  %v659 = vpop.permute.xlu0 %658
  %vm660 = vcmp.eq.s32.totalorder %v650, 1
  %vm661 = vcmp.eq.s32.totalorder %v653, 1
  %vm662 = vcmp.eq.s32.totalorder %v656, 1
  %vm663 = vcmp.eq.s32.totalorder %v659, 1
  %vm664 = vmand %vm640, %vm660
  %vm665 = vmand %vm641, %vm661
  %vm666 = vmand %vm642, %vm662
  %vm667 = vmand %vm643, %vm663
  %669 = vset.pattern.permute.xlu0 0
  %670 = vperm.xlu0 %669, %v512
  %v671 = vpop.permute.xlu0 %670
  %674 = vset.pattern.permute.xlu0 0
  %675 = vperm.xlu0 %674, %v513
  %v676 = vpop.permute.xlu0 %675
  %679 = vset.pattern.permute.xlu0 0
  %680 = vperm.xlu0 %679, %v514
  %v681 = vpop.permute.xlu0 %680
  %684 = vset.pattern.permute.xlu0 0
  %685 = vperm.xlu0 %684, %v515
  %v686 = vpop.permute.xlu0 %685
  %v688 = vsel %vm664, %v671, 0.0
  %v689 = vsel %vm665, %v676, 0.0
  %v690 = vsel %vm666, %v681, 0.0
  %v691 = vsel %vm667, %v686, 0.0
  %v692 = vadd.f32 %v688, 0.0
  %v693 = vadd.f32 %v689, 0.0
  %v694 = vadd.f32 %v690, 0.0
  %v695 = vadd.f32 %v691, 0.0
  %v696 = vadd.s32 %v479, 1
  %v697 = vadd.s32 %v480, 1
  %v698 = vadd.s32 %v481, 1
  %v699 = vadd.s32 %v482, 1
  %vm700 = vcmp.ge.s32.totalorder %v696, 0
  %vm701 = vcmp.ge.s32.totalorder %v697, 0
  %vm702 = vcmp.ge.s32.totalorder %v698, 0
  %vm703 = vcmp.ge.s32.totalorder %v699, 0
  %vm704 = vcmp.le.s32.totalorder %v696, 1
  %vm705 = vcmp.le.s32.totalorder %v697, 1
  %vm706 = vcmp.le.s32.totalorder %v698, 1
  %vm707 = vcmp.le.s32.totalorder %v699, 1
  %vm708 = vmand %vm700, %vm704
  %vm709 = vmand %vm701, %vm705
  %vm710 = vmand %vm702, %vm706
  %vm711 = vmand %vm703, %vm707
  %vm712 = vmand %vm708, %vm572
  %vm713 = vmand %vm709, %vm573
  %vm714 = vmand %vm710, %vm574
  %vm715 = vmand %vm711, %vm575
  %vm716 = vmand %vm712, %vm596
  %vm717 = vmand %vm713, %vm597
  %vm718 = vmand %vm714, %vm598
  %vm719 = vmand %vm715, %vm599
  %720 = vrot.lane.b32.xlu0 %v696, 127
  %v721 = vpop.permute.xlu0 %720
  %722 = vrot.lane.b32.xlu0 %v697, 127
  %v723 = vpop.permute.xlu0 %722
  %724 = vrot.lane.b32.xlu0 %v698, 127
  %v725 = vpop.permute.xlu0 %724
  %726 = vrot.lane.b32.xlu0 %v699, 127
  %v727 = vpop.permute.xlu0 %726
  %v728 = vadd.s32 %v612, %v721
  %v729 = vadd.s32 %v613, %v723
  %v730 = vadd.s32 %v614, %v725
  %v731 = vadd.s32 %v615, %v727
  %732 = vset.pattern.permute.xlu0 0
  %733 = vperm.xlu0 %732, %v728
  %v734 = vpop.permute.xlu0 %733
  %735 = vset.pattern.permute.xlu0 0
  %736 = vperm.xlu0 %735, %v729
  %v737 = vpop.permute.xlu0 %736
  %738 = vset.pattern.permute.xlu0 0
  %739 = vperm.xlu0 %738, %v730
  %v740 = vpop.permute.xlu0 %739
  %741 = vset.pattern.permute.xlu0 0
  %742 = vperm.xlu0 %741, %v731
  %v743 = vpop.permute.xlu0 %742
  %vm744 = vcmp.eq.s32.totalorder %v364, %v734
  %vm745 = vcmp.eq.s32.totalorder %v364, %v737
  %vm746 = vcmp.eq.s32.totalorder %v364, %v740
  %vm747 = vcmp.eq.s32.totalorder %v364, %v743
  %v748 = vsel %vm716, 1, 0
  %v749 = vsel %vm717, 1, 0
  %v750 = vsel %vm718, 1, 0
  %v751 = vsel %vm719, 1, 0
  %752 = vset.pattern.permute.xlu0 1
  %753 = vperm.xlu0 %752, %v748
  %v754 = vpop.permute.xlu0 %753
  %755 = vset.pattern.permute.xlu0 1
  %756 = vperm.xlu0 %755, %v749
  %v757 = vpop.permute.xlu0 %756
  %758 = vset.pattern.permute.xlu0 1
  %759 = vperm.xlu0 %758, %v750
  %v760 = vpop.permute.xlu0 %759
  %761 = vset.pattern.permute.xlu0 1
  %762 = vperm.xlu0 %761, %v751
  %v763 = vpop.permute.xlu0 %762
  %vm764 = vcmp.eq.s32.totalorder %v754, 1
  %vm765 = vcmp.eq.s32.totalorder %v757, 1
  %vm766 = vcmp.eq.s32.totalorder %v760, 1
  %vm767 = vcmp.eq.s32.totalorder %v763, 1
  %vm768 = vmand %vm744, %vm764
  %vm769 = vmand %vm745, %vm765
  %vm770 = vmand %vm746, %vm766
  %vm771 = vmand %vm747, %vm767
  %773 = vset.pattern.permute.xlu0 0
  %774 = vperm.xlu0 %773, %v532
  %v775 = vpop.permute.xlu0 %774
  %778 = vset.pattern.permute.xlu0 0
  %779 = vperm.xlu0 %778, %v533
  %v780 = vpop.permute.xlu0 %779
  %783 = vset.pattern.permute.xlu0 0
  %784 = vperm.xlu0 %783, %v534
  %v785 = vpop.permute.xlu0 %784
  %788 = vset.pattern.permute.xlu0 0
  %789 = vperm.xlu0 %788, %v535
  %v790 = vpop.permute.xlu0 %789
  %v792 = vsel %vm768, %v775, 0.0
  %v793 = vsel %vm769, %v780, 0.0
  %v794 = vsel %vm770, %v785, 0.0
  %v795 = vsel %vm771, %v790, 0.0
  %v796 = vadd.f32 %v692, %v792
  %v797 = vadd.f32 %v693, %v793
  %v798 = vadd.f32 %v694, %v794
  %v799 = vadd.f32 %v695, %v795
  %v800 = vadd.s32 %v483, 1
  %v801 = vadd.s32 %v484, 1
  %v802 = vadd.s32 %v485, 1
  %v803 = vadd.s32 %v486, 1
  %vm804 = vcmp.ge.s32.totalorder %v800, 0
  %vm805 = vcmp.ge.s32.totalorder %v801, 0
  %vm806 = vcmp.ge.s32.totalorder %v802, 0
  %vm807 = vcmp.ge.s32.totalorder %v803, 0
  %v808 = vsel %vm804, 1, 0
  %v809 = vsel %vm805, 1, 0
  %v810 = vsel %vm806, 1, 0
  %v811 = vsel %vm807, 1, 0
  %812 = vrot.lane.b32.xlu0 %v808, 1
  %v813 = vpop.permute.xlu0 %812
  %814 = vrot.lane.b32.xlu0 %v809, 1
  %v815 = vpop.permute.xlu0 %814
  %816 = vrot.lane.b32.xlu0 %v810, 1
  %v817 = vpop.permute.xlu0 %816
  %818 = vrot.lane.b32.xlu0 %v811, 1
  %v819 = vpop.permute.xlu0 %818
  %vm820 = vcmp.ne.s32.totalorder %v813, 0
  %vm821 = vcmp.ne.s32.totalorder %v815, 0
  %vm822 = vcmp.ne.s32.totalorder %v817, 0
  %vm823 = vcmp.ne.s32.totalorder %v819, 0
  %vm824 = vmand %vm552, %vm820
  %vm825 = vmand %vm553, %vm821
  %vm826 = vmand %vm554, %vm822
  %vm827 = vmand %vm555, %vm823
  %vm828 = vcmp.le.s32.totalorder %v800, 15
  %vm829 = vcmp.le.s32.totalorder %v801, 15
  %vm830 = vcmp.le.s32.totalorder %v802, 15
  %vm831 = vcmp.le.s32.totalorder %v803, 15
  %v832 = vsel %vm828, 1, 0
  %v833 = vsel %vm829, 1, 0
  %v834 = vsel %vm830, 1, 0
  %v835 = vsel %vm831, 1, 0
  %836 = vrot.lane.b32.xlu0 %v832, 1
  %v837 = vpop.permute.xlu0 %836
  %838 = vrot.lane.b32.xlu0 %v833, 1
  %v839 = vpop.permute.xlu0 %838
  %840 = vrot.lane.b32.xlu0 %v834, 1
  %v841 = vpop.permute.xlu0 %840
  %842 = vrot.lane.b32.xlu0 %v835, 1
  %v843 = vpop.permute.xlu0 %842
  %vm844 = vcmp.ne.s32.totalorder %v837, 0
  %vm845 = vcmp.ne.s32.totalorder %v839, 0
  %vm846 = vcmp.ne.s32.totalorder %v841, 0
  %vm847 = vcmp.ne.s32.totalorder %v843, 0
  %vm848 = vmand %vm824, %vm844
  %vm849 = vmand %vm825, %vm845
  %vm850 = vmand %vm826, %vm846
  %vm851 = vmand %vm827, %vm847
  %v852 = vmul.u32 %v800, 2
  %v853 = vmul.u32 %v801, 2
  %v854 = vmul.u32 %v802, 2
  %v855 = vmul.u32 %v803, 2
  %v856 = vadd.s32 %v604, %v852
  %v857 = vadd.s32 %v605, %v853
  %v858 = vadd.s32 %v606, %v854
  %v859 = vadd.s32 %v607, %v855
  %v860 = vadd.s32 %v856, %v617
  %v861 = vadd.s32 %v857, %v619
  %v862 = vadd.s32 %v858, %v621
  %v863 = vadd.s32 %v859, %v623
  %864 = vset.pattern.permute.xlu0 0
  %865 = vperm.xlu0 %864, %v860
  %v866 = vpop.permute.xlu0 %865
  %867 = vset.pattern.permute.xlu0 0
  %868 = vperm.xlu0 %867, %v861
  %v869 = vpop.permute.xlu0 %868
  %870 = vset.pattern.permute.xlu0 0
  %871 = vperm.xlu0 %870, %v862
  %v872 = vpop.permute.xlu0 %871
  %873 = vset.pattern.permute.xlu0 0
  %874 = vperm.xlu0 %873, %v863
  %v875 = vpop.permute.xlu0 %874
  %vm876 = vcmp.eq.s32.totalorder %v364, %v866
  %vm877 = vcmp.eq.s32.totalorder %v364, %v869
  %vm878 = vcmp.eq.s32.totalorder %v364, %v872
  %vm879 = vcmp.eq.s32.totalorder %v364, %v875
  %v880 = vsel %vm848, 1, 0
  %v881 = vsel %vm849, 1, 0
  %v882 = vsel %vm850, 1, 0
  %v883 = vsel %vm851, 1, 0
  %884 = vset.pattern.permute.xlu0 1
  %885 = vperm.xlu0 %884, %v880
  %v886 = vpop.permute.xlu0 %885
  %887 = vset.pattern.permute.xlu0 1
  %888 = vperm.xlu0 %887, %v881
  %v889 = vpop.permute.xlu0 %888
  %890 = vset.pattern.permute.xlu0 1
  %891 = vperm.xlu0 %890, %v882
  %v892 = vpop.permute.xlu0 %891
  %893 = vset.pattern.permute.xlu0 1
  %894 = vperm.xlu0 %893, %v883
  %v895 = vpop.permute.xlu0 %894
  %vm896 = vcmp.eq.s32.totalorder %v886, 1
  %vm897 = vcmp.eq.s32.totalorder %v889, 1
  %vm898 = vcmp.eq.s32.totalorder %v892, 1
  %vm899 = vcmp.eq.s32.totalorder %v895, 1
  %vm900 = vmand %vm876, %vm896
  %vm901 = vmand %vm877, %vm897
  %vm902 = vmand %vm878, %vm898
  %vm903 = vmand %vm879, %vm899
  %905 = vset.pattern.permute.xlu0 0
  %906 = vperm.xlu0 %905, %v536
  %v907 = vpop.permute.xlu0 %906
  %910 = vset.pattern.permute.xlu0 0
  %911 = vperm.xlu0 %910, %v537
  %v912 = vpop.permute.xlu0 %911
  %915 = vset.pattern.permute.xlu0 0
  %916 = vperm.xlu0 %915, %v538
  %v917 = vpop.permute.xlu0 %916
  %920 = vset.pattern.permute.xlu0 0
  %921 = vperm.xlu0 %920, %v539
  %v922 = vpop.permute.xlu0 %921
  %v924 = vsel %vm900, %v907, 0.0
  %v925 = vsel %vm901, %v912, 0.0
  %v926 = vsel %vm902, %v917, 0.0
  %v927 = vsel %vm903, %v922, 0.0
  %v928 = vadd.f32 %v796, %v924
  %v929 = vadd.f32 %v797, %v925
  %v930 = vadd.f32 %v798, %v926
  %v931 = vadd.f32 %v799, %v927
  %vm932 = vmand %vm708, %vm820
  %vm933 = vmand %vm709, %vm821
  %vm934 = vmand %vm710, %vm822
  %vm935 = vmand %vm711, %vm823
  %vm936 = vmand %vm932, %vm844
  %vm937 = vmand %vm933, %vm845
  %vm938 = vmand %vm934, %vm846
  %vm939 = vmand %vm935, %vm847
  %v940 = vadd.s32 %v856, %v721
  %v941 = vadd.s32 %v857, %v723
  %v942 = vadd.s32 %v858, %v725
  %v943 = vadd.s32 %v859, %v727
  %944 = vset.pattern.permute.xlu0 0
  %945 = vperm.xlu0 %944, %v940
  %v946 = vpop.permute.xlu0 %945
  %947 = vset.pattern.permute.xlu0 0
  %948 = vperm.xlu0 %947, %v941
  %v949 = vpop.permute.xlu0 %948
  %950 = vset.pattern.permute.xlu0 0
  %951 = vperm.xlu0 %950, %v942
  %v952 = vpop.permute.xlu0 %951
  %953 = vset.pattern.permute.xlu0 0
  %954 = vperm.xlu0 %953, %v943
  %v955 = vpop.permute.xlu0 %954
  %vm956 = vcmp.eq.s32.totalorder %v364, %v946
  %vm957 = vcmp.eq.s32.totalorder %v364, %v949
  %vm958 = vcmp.eq.s32.totalorder %v364, %v952
  %vm959 = vcmp.eq.s32.totalorder %v364, %v955
  %v960 = vsel %vm936, 1, 0
  %v961 = vsel %vm937, 1, 0
  %v962 = vsel %vm938, 1, 0
  %v963 = vsel %vm939, 1, 0
  %964 = vset.pattern.permute.xlu0 1
  %965 = vperm.xlu0 %964, %v960
  %v966 = vpop.permute.xlu0 %965
  %967 = vset.pattern.permute.xlu0 1
  %968 = vperm.xlu0 %967, %v961
  %v969 = vpop.permute.xlu0 %968
  %970 = vset.pattern.permute.xlu0 1
  %971 = vperm.xlu0 %970, %v962
  %v972 = vpop.permute.xlu0 %971
  %973 = vset.pattern.permute.xlu0 1
  %974 = vperm.xlu0 %973, %v963
  %v975 = vpop.permute.xlu0 %974
  %vm976 = vcmp.eq.s32.totalorder %v966, 1
  %vm977 = vcmp.eq.s32.totalorder %v969, 1
  %vm978 = vcmp.eq.s32.totalorder %v972, 1
  %vm979 = vcmp.eq.s32.totalorder %v975, 1
  %vm980 = vmand %vm956, %vm976
  %vm981 = vmand %vm957, %vm977
  %vm982 = vmand %vm958, %vm978
  %vm983 = vmand %vm959, %vm979
  %985 = vset.pattern.permute.xlu0 0
  %986 = vperm.xlu0 %985, %v540
  %v987 = vpop.permute.xlu0 %986
  %990 = vset.pattern.permute.xlu0 0
  %991 = vperm.xlu0 %990, %v541
  %v992 = vpop.permute.xlu0 %991
  %995 = vset.pattern.permute.xlu0 0
  %996 = vperm.xlu0 %995, %v542
  %v997 = vpop.permute.xlu0 %996
  %1000 = vset.pattern.permute.xlu0 0
  %1001 = vperm.xlu0 %1000, %v543
  %v1002 = vpop.permute.xlu0 %1001
  %v1004 = vsel %vm980, %v987, 0.0
  %v1005 = vsel %vm981, %v992, 0.0
  %v1006 = vsel %vm982, %v997, 0.0
  %v1007 = vsel %vm983, %v1002, 0.0
  %v1008 = vadd.f32 %v928, %v1004
  %v1009 = vadd.f32 %v929, %v1005
  %v1010 = vadd.f32 %v930, %v1006
  %v1011 = vadd.f32 %v931, %v1007
  %v1013 = vsel %vm80, %v1008, 0
  %v1016 = vsel %vm80, %v1009, 0
  %v1019 = vsel %vm80, %v1010, 0
  %v1022 = vsel %vm80, %v1011, 0
  %1024 = vmatprep.subr.mxu0 0.0
  %1025 = vmatpush1.msra.mxu0 %v32
  %1026 = vmatprep.subr.mxu0 0.0
  %1027 = vmatpush1.msra.mxu0 %v33
  %1028 = vmatprep.subr.mxu0 0.0
  %1029 = vmatpush1.msra.mxu0 %v34
  %1030 = vmatprep.subr.mxu0 0.0
  %1031 = vmatpush1.msra.mxu0 %v35
  %1032 = vmatprep.subr.mxu0 0.0
  %1033 = vmatpush1.msra.mxu0 %v36
  %1034 = vmatprep.subr.mxu0 0.0
  %1035 = vmatpush1.msra.mxu0 %v37
  %1036 = vmatprep.subr.mxu0 0.0
  %1037 = vmatpush1.msra.mxu0 %v38
  %1038 = vmatprep.subr.mxu0 0.0
  %1039 = vmatpush1.msra.mxu0 %v39
  %1040 = vmatprep.subr.mxu0 0.0
  %1041 = vmatpush1.msra.mxu0 0.0
  %1042 = vmatprep.subr.mxu0 0.0
  %1043 = vmatpush1.msra.mxu0 0.0
  %1044 = vmatprep.subr.mxu0 0.0
  %1045 = vmatpush1.msra.mxu0 0.0
  %1046 = vmatprep.subr.mxu0 0.0
  %1047 = vmatpush1.msra.mxu0 0.0
  %1048 = vmatprep.subr.mxu0 0.0
  %1049 = vmatpush1.msra.mxu0 0.0
  %1050 = vmatprep.subr.mxu0 0.0
  %1051 = vmatpush1.msra.mxu0 0.0
  %1052 = vmatprep.subr.mxu0 0.0
  %1053 = vmatpush1.msra.mxu0 0.0
  %1054 = vmatprep.subr.mxu0 0.0
  %1055 = vmatpush1.msra.mxu0 0.0
  %1056 = vmatprep.subr.mxu0 0.0
  %1057 = vmatpush1.msra.mxu0 0.0
  %1058 = vmatprep.subr.mxu0 0.0
  %1059 = vmatpush1.msra.mxu0 0.0
  %1060 = vmatprep.subr.mxu0 0.0
  %1061 = vmatpush1.msra.mxu0 0.0
  %1062 = vmatprep.subr.mxu0 0.0
  %1063 = vmatpush1.msra.mxu0 0.0
  %1064 = vmatprep.subr.mxu0 0.0
  %1065 = vmatpush1.msra.mxu0 0.0
  %1066 = vmatprep.subr.mxu0 0.0
  %1067 = vmatpush1.msra.mxu0 0.0
  %1068 = vmatprep.subr.mxu0 0.0
  %1069 = vmatpush1.msra.mxu0 0.0
  %1070 = vmatprep.subr.mxu0 0.0
  %1071 = vmatpush1.msra.mxu0 0.0
  %1072 = vmatprep.subr.mxu0 0.0
  %1073 = vmatpush1.msra.mxu0 0.0
  %1074 = vmatprep.subr.mxu0 0.0
  %1075 = vmatpush1.msra.mxu0 0.0
  %1076 = vmatprep.subr.mxu0 0.0
  %1077 = vmatpush1.msra.mxu0 0.0
  %1078 = vmatprep.subr.mxu0 0.0
  %1079 = vmatpush1.msra.mxu0 0.0
  %1080 = vmatprep.subr.mxu0 0.0
  %1081 = vmatpush1.msra.mxu0 0.0
  %1082 = vmatprep.subr.mxu0 0.0
  %1083 = vmatpush1.msra.mxu0 0.0
  %1084 = vmatprep.subr.mxu0 0.0
  %1085 = vmatpush1.msra.mxu0 0.0
  %1086 = vmatprep.subr.mxu0 0.0
  %1087 = vmatpush1.msra.mxu0 0.0
  %1088 = vmatprep.mubr.f32.mxu0 0.0
  %1089 = vmatmul.mubr.f32.gmra.mrb[0].mxu0 %v1013
  %v1090 = vpop.f32.mrb[0].mxu0
  %v1091 = vadd.f32 0.0, %v1090
  %v1092 = vpop.f32.mrb[0].mxu0
  %1093 = vmatprep.mubr.f32.mxu0 0.0
  %1094 = vmatmul.mubr.f32.gmra.mrb[0].mxu0 %v1016
  %v1095 = vpop.f32.mrb[0].mxu0
  %v1096 = vadd.f32 0.0, %v1095
  %v1097 = vpop.f32.mrb[0].mxu0
  %1098 = vmatprep.mubr.f32.mxu0 0.0
  %1099 = vmatmul.mubr.f32.gmra.mrb[0].mxu0 %v1019
  %v1100 = vpop.f32.mrb[0].mxu0
  %v1101 = vadd.f32 0.0, %v1100
  %v1102 = vpop.f32.mrb[0].mxu0
  %1103 = vmatprep.mubr.f32.mxu0 0.0
  %1104 = vmatmul.mubr.f32.gmra.mrb[0].mxu0 %v1022
  %v1105 = vpop.f32.mrb[0].mxu0
  %v1106 = vadd.f32 0.0, %v1105
  %v1107 = vpop.f32.mrb[0].mxu0
  %1108 = vdwg.mxu0
  %v1109 = vlaneseq
  %v1110 = vshrl.u32 %v1109, 7
  %v1111 = vsub.s32 2, %v1110
  %v1112 = vrot.slane %v31, %v1111
  %vm1113 = vcmask 15360
  %v1115 = vsel %vm1113, %v1091, 0
  %v1118 = vsel %vm1113, %v1096, 0
  %v1121 = vsel %vm1113, %v1101, 0
  %v1124 = vsel %vm1113, %v1106, 0
  %vm1126 = vcmask 1041408
  %v1128 = vsel %vm1126, %v31, 0
  %1130 = vmatprep.subr.mxu0 0.0
  %1131 = vmatpush1.msra.mxu0 %v1128
  %1132 = vmatprep.subr.mxu0 0.0
  %1133 = vmatpush1.msra.mxu0 0.0
  %1134 = vmatprep.subr.mxu0 0.0
  %1135 = vmatpush1.msra.mxu0 0.0
  %1136 = vmatprep.subr.mxu0 0.0
  %1137 = vmatpush1.msra.mxu0 0.0
  %1138 = vmatprep.subr.mxu0 0.0
  %1139 = vmatpush1.msra.mxu0 0.0
  %1140 = vmatprep.subr.mxu0 0.0
  %1141 = vmatpush1.msra.mxu0 0.0
  %1142 = vmatprep.subr.mxu0 0.0
  %1143 = vmatpush1.msra.mxu0 0.0
  %1144 = vmatprep.subr.mxu0 0.0
  %1145 = vmatpush1.msra.mxu0 0.0
  %1146 = vmatprep.subr.mxu0 0.0
  %1147 = vmatpush1.msra.mxu0 0.0
  %1148 = vmatprep.subr.mxu0 0.0
  %1149 = vmatpush1.msra.mxu0 0.0
  %1150 = vmatprep.subr.mxu0 0.0
  %1151 = vmatpush1.msra.mxu0 0.0
  %1152 = vmatprep.subr.mxu0 0.0
  %1153 = vmatpush1.msra.mxu0 0.0
  %1154 = vmatprep.subr.mxu0 0.0
  %1155 = vmatpush1.msra.mxu0 0.0
  %1156 = vmatprep.subr.mxu0 0.0
  %1157 = vmatpush1.msra.mxu0 0.0
  %1158 = vmatprep.subr.mxu0 0.0
  %1159 = vmatpush1.msra.mxu0 0.0
  %1160 = vmatprep.subr.mxu0 0.0
  %1161 = vmatpush1.msra.mxu0 0.0
  %1162 = vmatprep.subr.mxu0 0.0
  %1163 = vmatpush1.msra.mxu0 0.0
  %1164 = vmatprep.subr.mxu0 0.0
  %1165 = vmatpush1.msra.mxu0 0.0
  %1166 = vmatprep.subr.mxu0 0.0
  %1167 = vmatpush1.msra.mxu0 0.0
  %1168 = vmatprep.subr.mxu0 0.0
  %1169 = vmatpush1.msra.mxu0 0.0
  %1170 = vmatprep.subr.mxu0 0.0
  %1171 = vmatpush1.msra.mxu0 0.0
  %1172 = vmatprep.subr.mxu0 0.0
  %1173 = vmatpush1.msra.mxu0 0.0
  %1174 = vmatprep.subr.mxu0 0.0
  %1175 = vmatpush1.msra.mxu0 0.0
  %1176 = vmatprep.subr.mxu0 0.0
  %1177 = vmatpush1.msra.mxu0 0.0
  %1178 = vmatprep.subr.mxu0 0.0
  %1179 = vmatpush1.msra.mxu0 0.0
  %1180 = vmatprep.subr.mxu0 0.0
  %1181 = vmatpush1.msra.mxu0 0.0
  %1182 = vmatprep.subr.mxu0 0.0
  %1183 = vmatpush1.msra.mxu0 0.0
  %1184 = vmatprep.subr.mxu0 0.0
  %1185 = vmatpush1.msra.mxu0 0.0
  %1186 = vmatprep.subr.mxu0 0.0
  %1187 = vmatpush1.msra.mxu0 0.0
  %1188 = vmatprep.subr.mxu0 0.0
  %1189 = vmatpush1.msra.mxu0 0.0
  %1190 = vmatprep.subr.mxu0 0.0
  %1191 = vmatpush1.msra.mxu0 0.0
  %1192 = vmatprep.subr.mxu0 0.0
  %1193 = vmatpush1.msra.mxu0 0.0
  %1194 = vmatprep.mubr.f32.mxu0 0.0
  %1195 = vmatmul.mubr.f32.gmra.mrb[0].mxu0 %v1115
  %v1196 = vpop.f32.mrb[0].mxu0
  %v1197 = vadd.f32 %v1112, %v1196
  %v1198 = vpop.f32.mrb[0].mxu0
  %1199 = vmatprep.mubr.f32.mxu0 0.0
  %1200 = vmatmul.mubr.f32.gmra.mrb[0].mxu0 %v1118
  %v1201 = vpop.f32.mrb[0].mxu0
  %v1202 = vadd.f32 %v1112, %v1201
  %v1203 = vpop.f32.mrb[0].mxu0
  %1204 = vmatprep.mubr.f32.mxu0 0.0
  %1205 = vmatmul.mubr.f32.gmra.mrb[0].mxu0 %v1121
  %v1206 = vpop.f32.mrb[0].mxu0
  %v1207 = vadd.f32 %v1112, %v1206
  %v1208 = vpop.f32.mrb[0].mxu0
  %1209 = vmatprep.mubr.f32.mxu0 0.0
  %1210 = vmatmul.mubr.f32.gmra.mrb[0].mxu0 %v1124
  %v1211 = vpop.f32.mrb[0].mxu0
  %v1212 = vadd.f32 %v1112, %v1211
  %v1213 = vpop.f32.mrb[0].mxu0
  %1214 = vdwg.mxu0
  %v1216 = vsel %vm1113, %v164, 0
  %v1219 = vsel %vm1113, %v169, 0
  %v1222 = vsel %vm1113, %v174, 0
  %v1225 = vsel %vm1113, %v179, 0
  %v1228 = vsel %vm1113, %v184, 0
  %v1231 = vsel %vm1113, %v189, 0
  %v1234 = vsel %vm1113, %v194, 0
  %v1237 = vsel %vm1113, %v199, 0
  %v1240 = vsel %vm1113, %v1197, 0
  %v1243 = vsel %vm1113, %v1202, 0
  %v1246 = vsel %vm1113, %v1207, 0
  %v1249 = vsel %vm1113, %v1212, 0
  %1251 = vmatprep.subr.mxu0 0.0
  %1252 = vmatpush1.xpose.msra.mxu0 %v1240
  %1253 = vmatprep.subr.mxu0 0.0
  %1254 = vmatpush1.xpose.msra.mxu0 %v1243
  %1255 = vmatprep.subr.mxu0 0.0
  %1256 = vmatpush1.xpose.msra.mxu0 %v1246
  %1257 = vmatprep.subr.mxu0 0.0
  %1258 = vmatpush1.xpose.msra.mxu0 %v1249
  %1259 = vmatprep.subr.mxu0 0.0
  %1260 = vmatpush1.xpose.msra.mxu0 0.0
  %1261 = vmatprep.subr.mxu0 0.0
  %1262 = vmatpush1.xpose.msra.mxu0 0.0
  %1263 = vmatprep.subr.mxu0 0.0
  %1264 = vmatpush1.xpose.msra.mxu0 0.0
  %1265 = vmatprep.subr.mxu0 0.0
  %1266 = vmatpush1.xpose.msra.mxu0 0.0
  %1267 = vmatprep.subr.mxu0 0.0
  %1268 = vmatpush1.xpose.msra.mxu0 0.0
  %1269 = vmatprep.subr.mxu0 0.0
  %1270 = vmatpush1.xpose.msra.mxu0 0.0
  %1271 = vmatprep.subr.mxu0 0.0
  %1272 = vmatpush1.xpose.msra.mxu0 0.0
  %1273 = vmatprep.subr.mxu0 0.0
  %1274 = vmatpush1.xpose.msra.mxu0 0.0
  %1275 = vmatprep.subr.mxu0 0.0
  %1276 = vmatpush1.xpose.msra.mxu0 0.0
  %1277 = vmatprep.subr.mxu0 0.0
  %1278 = vmatpush1.xpose.msra.mxu0 0.0
  %1279 = vmatprep.subr.mxu0 0.0
  %1280 = vmatpush1.xpose.msra.mxu0 0.0
  %1281 = vmatprep.subr.mxu0 0.0
  %1282 = vmatpush1.xpose.msra.mxu0 0.0
  %1283 = vmatprep.subr.mxu0 0.0
  %1284 = vmatpush1.xpose.msra.mxu0 0.0
  %1285 = vmatprep.subr.mxu0 0.0
  %1286 = vmatpush1.xpose.msra.mxu0 0.0
  %1287 = vmatprep.subr.mxu0 0.0
  %1288 = vmatpush1.xpose.msra.mxu0 0.0
  %1289 = vmatprep.subr.mxu0 0.0
  %1290 = vmatpush1.xpose.msra.mxu0 0.0
  %1291 = vmatprep.subr.mxu0 0.0
  %1292 = vmatpush1.xpose.msra.mxu0 0.0
  %1293 = vmatprep.subr.mxu0 0.0
  %1294 = vmatpush1.xpose.msra.mxu0 0.0
  %1295 = vmatprep.subr.mxu0 0.0
  %1296 = vmatpush1.xpose.msra.mxu0 0.0
  %1297 = vmatprep.subr.mxu0 0.0
  %1298 = vmatpush1.xpose.msra.mxu0 0.0
  %1299 = vmatprep.subr.mxu0 0.0
  %1300 = vmatpush1.xpose.msra.mxu0 0.0
  %1301 = vmatprep.subr.mxu0 0.0
  %1302 = vmatpush1.xpose.msra.mxu0 0.0
  %1303 = vmatprep.subr.mxu0 0.0
  %1304 = vmatpush1.xpose.msra.mxu0 0.0
  %1305 = vmatprep.subr.mxu0 0.0
  %1306 = vmatpush1.xpose.msra.mxu0 0.0
  %1307 = vmatprep.subr.mxu0 0.0
  %1308 = vmatpush1.xpose.msra.mxu0 0.0
  %1309 = vmatprep.subr.mxu0 0.0
  %1310 = vmatpush1.xpose.msra.mxu0 0.0
  %1311 = vmatprep.subr.mxu0 0.0
  %1312 = vmatpush1.xpose.msra.mxu0 0.0
  %1313 = vmatprep.subr.mxu0 0.0
  %1314 = vmatpush1.xpose.msra.mxu0 0.0
  %1315 = vmatprep.mubr.f32.mxu0 0.0
  %1316 = vmatmul.mubr.f32.gmra.mrb[0].mxu0 %v1216
  %v1317 = vpop.f32.mrb[0].mxu0
  %v1318 = vadd.f32 0.0, %v1317
  %v1319 = vpop.f32.mrb[0].mxu0
  %1320 = vmatprep.mubr.f32.mxu0 0.0
  %1321 = vmatmul.mubr.f32.gmra.mrb[0].mxu0 %v1219
  %v1322 = vpop.f32.mrb[0].mxu0
  %v1323 = vadd.f32 0.0, %v1322
  %v1324 = vpop.f32.mrb[0].mxu0
  %1325 = vmatprep.mubr.f32.mxu0 0.0
  %1326 = vmatmul.mubr.f32.gmra.mrb[0].mxu0 %v1222
  %v1327 = vpop.f32.mrb[0].mxu0
  %v1328 = vadd.f32 0.0, %v1327
  %v1329 = vpop.f32.mrb[0].mxu0
  %1330 = vmatprep.mubr.f32.mxu0 0.0
  %1331 = vmatmul.mubr.f32.gmra.mrb[0].mxu0 %v1225
  %v1332 = vpop.f32.mrb[0].mxu0
  %v1333 = vadd.f32 0.0, %v1332
  %v1334 = vpop.f32.mrb[0].mxu0
  %1335 = vmatprep.mubr.f32.mxu0 0.0
  %1336 = vmatmul.mubr.f32.gmra.mrb[0].mxu0 %v1228
  %v1337 = vpop.f32.mrb[0].mxu0
  %v1338 = vadd.f32 0.0, %v1337
  %v1339 = vpop.f32.mrb[0].mxu0
  %1340 = vmatprep.mubr.f32.mxu0 0.0
  %1341 = vmatmul.mubr.f32.gmra.mrb[0].mxu0 %v1231
  %v1342 = vpop.f32.mrb[0].mxu0
  %v1343 = vadd.f32 0.0, %v1342
  %v1344 = vpop.f32.mrb[0].mxu0
  %1345 = vmatprep.mubr.f32.mxu0 0.0
  %1346 = vmatmul.mubr.f32.gmra.mrb[0].mxu0 %v1234
  %v1347 = vpop.f32.mrb[0].mxu0
  %v1348 = vadd.f32 0.0, %v1347
  %v1349 = vpop.f32.mrb[0].mxu0
  %1350 = vmatprep.mubr.f32.mxu0 0.0
  %1351 = vmatmul.mubr.f32.gmra.mrb[0].mxu0 %v1237
  %v1352 = vpop.f32.mrb[0].mxu0
  %v1353 = vadd.f32 0.0, %v1352
  %v1354 = vpop.f32.mrb[0].mxu0
  %1355 = vdwg.mxu0
  %v1356 = vadd.s32 %v488, 32
  %v1357 = vadd.s32 %v488, 40
  %v1358 = vadd.s32 %v488, 48
  %v1359 = vadd.s32 %v488, 56
  %v1360 = vshra.s32 %v488, 5
  %v1361 = vshra.s32 %v489, 5
  %v1362 = vshra.s32 %v490, 5
  %v1363 = vshra.s32 %v491, 5
  %v1364 = vshra.s32 %v1356, 5
  %v1365 = vshra.s32 %v1357, 5
  %v1366 = vshra.s32 %v1358, 5
  %v1367 = vshra.s32 %v1359, 5
  %v1368 = vshra.s32 %v364, 4
  %vm1369 = vcmp.eq.s32.totalorder %v1360, %v1368
  %vm1370 = vcmp.eq.s32.totalorder %v1361, %v1368
  %vm1371 = vcmp.eq.s32.totalorder %v1362, %v1368
  %vm1372 = vcmp.eq.s32.totalorder %v1363, %v1368
  %vm1373 = vcmp.eq.s32.totalorder %v1364, %v1368
  %vm1374 = vcmp.eq.s32.totalorder %v1365, %v1368
  %vm1375 = vcmp.eq.s32.totalorder %v1366, %v1368
  %vm1376 = vcmp.eq.s32.totalorder %v1367, %v1368
  %v1377 = vsel %vm1369, %v1318, -1e+30
  %v1378 = vsel %vm1370, %v1323, -1e+30
  %v1379 = vsel %vm1371, %v1328, -1e+30
  %v1380 = vsel %vm1372, %v1333, -1e+30
  %v1381 = vsel %vm1373, %v1338, -1e+30
  %v1382 = vsel %vm1374, %v1343, -1e+30
  %v1383 = vsel %vm1375, %v1348, -1e+30
  %v1384 = vsel %vm1376, %v1353, -1e+30
  %vm1385 = vcmask 261120
  %v1386 = vsel %vm1385, %v1377, -inf
  %1387 = vmax.xlane.f32.xlu0 %v1386
  %v1388 = vpop.xlane.xlu0 %1387
  %v1389 = vsel %vm1385, %v1378, -inf
  %1390 = vmax.xlane.f32.xlu0 %v1389
  %v1391 = vpop.xlane.xlu0 %1390
  %v1392 = vsel %vm1385, %v1379, -inf
  %1393 = vmax.xlane.f32.xlu0 %v1392
  %v1394 = vpop.xlane.xlu0 %1393
  %v1395 = vsel %vm1385, %v1380, -inf
  %1396 = vmax.xlane.f32.xlu0 %v1395
  %v1397 = vpop.xlane.xlu0 %1396
  %v1398 = vsel %vm1385, %v1381, -inf
  %1399 = vmax.xlane.f32.xlu0 %v1398
  %v1400 = vpop.xlane.xlu0 %1399
  %v1401 = vsel %vm1385, %v1382, -inf
  %1402 = vmax.xlane.f32.xlu0 %v1401
  %v1403 = vpop.xlane.xlu0 %1402
  %v1404 = vsel %vm1385, %v1383, -inf
  %1405 = vmax.xlane.f32.xlu0 %v1404
  %v1406 = vpop.xlane.xlu0 %1405
  %v1407 = vsel %vm1385, %v1384, -inf
  %1408 = vmax.xlane.f32.xlu0 %v1407
  %v1409 = vpop.xlane.xlu0 %1408
  %v1410 = vsub.f32 %v1377, %v1388
  %v1411 = vsub.f32 %v1378, %v1391
  %v1412 = vsub.f32 %v1379, %v1394
  %v1413 = vsub.f32 %v1380, %v1397
  %v1414 = vsub.f32 %v1381, %v1400
  %v1415 = vsub.f32 %v1382, %v1403
  %v1416 = vsub.f32 %v1383, %v1406
  %v1417 = vsub.f32 %v1384, %v1409
  %v1418 = vmul.f32 %v1410, 1.442695
  %v1419 = vpow.pop %v1418
  %v1420 = vmul.f32 %v1411, 1.442695
  %v1421 = vpow.pop %v1420
  %v1422 = vmul.f32 %v1412, 1.442695
  %v1423 = vpow.pop %v1422
  %v1424 = vmul.f32 %v1413, 1.442695
  %v1425 = vpow.pop %v1424
  %v1426 = vmul.f32 %v1414, 1.442695
  %v1427 = vpow.pop %v1426
  %v1428 = vmul.f32 %v1415, 1.442695
  %v1429 = vpow.pop %v1428
  %v1430 = vmul.f32 %v1416, 1.442695
  %v1431 = vpow.pop %v1430
  %v1432 = vmul.f32 %v1417, 1.442695
  %v1433 = vpow.pop %v1432
  %v1434 = vsel %vm1385, %v1419, 0.0
  %1435 = vadd.xlane.f32.xlu0 %v1434
  %v1436 = vpop.xlane.xlu0 %1435
  %v1437 = vsel %vm1385, %v1421, 0.0
  %1438 = vadd.xlane.f32.xlu0 %v1437
  %v1439 = vpop.xlane.xlu0 %1438
  %v1440 = vsel %vm1385, %v1423, 0.0
  %1441 = vadd.xlane.f32.xlu0 %v1440
  %v1442 = vpop.xlane.xlu0 %1441
  %v1443 = vsel %vm1385, %v1425, 0.0
  %1444 = vadd.xlane.f32.xlu0 %v1443
  %v1445 = vpop.xlane.xlu0 %1444
  %v1446 = vsel %vm1385, %v1427, 0.0
  %1447 = vadd.xlane.f32.xlu0 %v1446
  %v1448 = vpop.xlane.xlu0 %1447
  %v1449 = vsel %vm1385, %v1429, 0.0
  %1450 = vadd.xlane.f32.xlu0 %v1449
  %v1451 = vpop.xlane.xlu0 %1450
  %v1452 = vsel %vm1385, %v1431, 0.0
  %1453 = vadd.xlane.f32.xlu0 %v1452
  %v1454 = vpop.xlane.xlu0 %1453
  %v1455 = vsel %vm1385, %v1433, 0.0
  %1456 = vadd.xlane.f32.xlu0 %v1455
  %v1457 = vpop.xlane.xlu0 %1456
  %v1458 = vrcp.pop %v1436
  %v1459 = vrcp.pop %v1439
  %v1460 = vrcp.pop %v1442
  %v1461 = vrcp.pop %v1445
  %v1462 = vrcp.pop %v1448
  %v1463 = vrcp.pop %v1451
  %v1464 = vrcp.pop %v1454
  %v1465 = vrcp.pop %v1457
  %v1466 = vmul.f32 %v1419, %v1458
  %v1467 = vmul.f32 %v1421, %v1459
  %v1468 = vmul.f32 %v1423, %v1460
  %v1469 = vmul.f32 %v1425, %v1461
  %v1470 = vmul.f32 %v1427, %v1462
  %v1471 = vmul.f32 %v1429, %v1463
  %v1472 = vmul.f32 %v1431, %v1464
  %v1473 = vmul.f32 %v1433, %v1465
  %1474 = vrot.lane.b32.xlu0 %v1197, 126
  %v1475 = vpop.permute.xlu0 %1474
  %1476 = vrot.lane.b32.xlu0 %v1202, 126
  %v1477 = vpop.permute.xlu0 %1476
  %1478 = vrot.lane.b32.xlu0 %v1207, 126
  %v1479 = vpop.permute.xlu0 %1478
  %1480 = vrot.lane.b32.xlu0 %v1212, 126
  %v1481 = vpop.permute.xlu0 %1480
  %v1487 = vsel %vm1385, %v1466, 0
  %v1490 = vsel %vm1385, %v1467, 0
  %v1493 = vsel %vm1385, %v1468, 0
  %v1496 = vsel %vm1385, %v1469, 0
  %v1499 = vsel %vm1385, %v1470, 0
  %v1502 = vsel %vm1385, %v1471, 0
  %v1505 = vsel %vm1385, %v1472, 0
  %v1508 = vsel %vm1385, %v1473, 0
  %1510 = vmatprep.subr.mxu0 0.0
  %1511 = vmatpush1.msra.mxu0 %v1475
  %1512 = vmatprep.subr.mxu0 0.0
  %1513 = vmatpush1.msra.mxu0 %v1477
  %1514 = vmatprep.subr.mxu0 0.0
  %1515 = vmatpush1.msra.mxu0 %v1479
  %1516 = vmatprep.subr.mxu0 0.0
  %1517 = vmatpush1.msra.mxu0 %v1481
  %1518 = vmatprep.subr.mxu0 0.0
  %1519 = vmatpush1.msra.mxu0 0.0
  %1520 = vmatprep.subr.mxu0 0.0
  %1521 = vmatpush1.msra.mxu0 0.0
  %1522 = vmatprep.subr.mxu0 0.0
  %1523 = vmatpush1.msra.mxu0 0.0
  %1524 = vmatprep.subr.mxu0 0.0
  %1525 = vmatpush1.msra.mxu0 0.0
  %1526 = vmatprep.subr.mxu0 0.0
  %1527 = vmatpush1.msra.mxu0 0.0
  %1528 = vmatprep.subr.mxu0 0.0
  %1529 = vmatpush1.msra.mxu0 0.0
  %1530 = vmatprep.subr.mxu0 0.0
  %1531 = vmatpush1.msra.mxu0 0.0
  %1532 = vmatprep.subr.mxu0 0.0
  %1533 = vmatpush1.msra.mxu0 0.0
  %1534 = vmatprep.subr.mxu0 0.0
  %1535 = vmatpush1.msra.mxu0 0.0
  %1536 = vmatprep.subr.mxu0 0.0
  %1537 = vmatpush1.msra.mxu0 0.0
  %1538 = vmatprep.subr.mxu0 0.0
  %1539 = vmatpush1.msra.mxu0 0.0
  %1540 = vmatprep.subr.mxu0 0.0
  %1541 = vmatpush1.msra.mxu0 0.0
  %1542 = vmatprep.subr.mxu0 0.0
  %1543 = vmatpush1.msra.mxu0 0.0
  %1544 = vmatprep.subr.mxu0 0.0
  %1545 = vmatpush1.msra.mxu0 0.0
  %1546 = vmatprep.subr.mxu0 0.0
  %1547 = vmatpush1.msra.mxu0 0.0
  %1548 = vmatprep.subr.mxu0 0.0
  %1549 = vmatpush1.msra.mxu0 0.0
  %1550 = vmatprep.subr.mxu0 0.0
  %1551 = vmatpush1.msra.mxu0 0.0
  %1552 = vmatprep.subr.mxu0 0.0
  %1553 = vmatpush1.msra.mxu0 0.0
  %1554 = vmatprep.subr.mxu0 0.0
  %1555 = vmatpush1.msra.mxu0 0.0
  %1556 = vmatprep.subr.mxu0 0.0
  %1557 = vmatpush1.msra.mxu0 0.0
  %1558 = vmatprep.subr.mxu0 0.0
  %1559 = vmatpush1.msra.mxu0 0.0
  %1560 = vmatprep.subr.mxu0 0.0
  %1561 = vmatpush1.msra.mxu0 0.0
  %1562 = vmatprep.subr.mxu0 0.0
  %1563 = vmatpush1.msra.mxu0 0.0
  %1564 = vmatprep.subr.mxu0 0.0
  %1565 = vmatpush1.msra.mxu0 0.0
  %1566 = vmatprep.subr.mxu0 0.0
  %1567 = vmatpush1.msra.mxu0 0.0
  %1568 = vmatprep.subr.mxu0 0.0
  %1569 = vmatpush1.msra.mxu0 0.0
  %1570 = vmatprep.subr.mxu0 0.0
  %1571 = vmatpush1.msra.mxu0 0.0
  %1572 = vmatprep.subr.mxu0 0.0
  %1573 = vmatpush1.msra.mxu0 0.0
  %1574 = vmatprep.mubr.f32.mxu0 0.0
  %1575 = vmatmul.mubr.f32.gmra.mrb[0].mxu0 %v1487
  %v1576 = vpop.f32.mrb[0].mxu0
  %v1577 = vadd.f32 0.0, %v1576
  %v1578 = vpop.f32.mrb[0].mxu0
  %1579 = vmatprep.mubr.f32.mxu0 0.0
  %1580 = vmatmul.mubr.f32.gmra.mrb[0].mxu0 %v1490
  %v1581 = vpop.f32.mrb[0].mxu0
  %v1582 = vadd.f32 0.0, %v1581
  %v1583 = vpop.f32.mrb[0].mxu0
  %1584 = vmatprep.mubr.f32.mxu0 0.0
  %1585 = vmatmul.mubr.f32.gmra.mrb[0].mxu0 %v1493
  %v1586 = vpop.f32.mrb[0].mxu0
  %v1587 = vadd.f32 0.0, %v1586
  %v1588 = vpop.f32.mrb[0].mxu0
  %1589 = vmatprep.mubr.f32.mxu0 0.0
  %1590 = vmatmul.mubr.f32.gmra.mrb[0].mxu0 %v1496
  %v1591 = vpop.f32.mrb[0].mxu0
  %v1592 = vadd.f32 0.0, %v1591
  %v1593 = vpop.f32.mrb[0].mxu0
  %1594 = vmatprep.mubr.f32.mxu0 0.0
  %1595 = vmatmul.mubr.f32.gmra.mrb[0].mxu0 %v1499
  %v1596 = vpop.f32.mrb[0].mxu0
  %v1597 = vadd.f32 0.0, %v1596
  %v1598 = vpop.f32.mrb[0].mxu0
  %1599 = vmatprep.mubr.f32.mxu0 0.0
  %1600 = vmatmul.mubr.f32.gmra.mrb[0].mxu0 %v1502
  %v1601 = vpop.f32.mrb[0].mxu0
  %v1602 = vadd.f32 0.0, %v1601
  %v1603 = vpop.f32.mrb[0].mxu0
  %1604 = vmatprep.mubr.f32.mxu0 0.0
  %1605 = vmatmul.mubr.f32.gmra.mrb[0].mxu0 %v1505
  %v1606 = vpop.f32.mrb[0].mxu0
  %v1607 = vadd.f32 0.0, %v1606
  %v1608 = vpop.f32.mrb[0].mxu0
  %1609 = vmatprep.mubr.f32.mxu0 0.0
  %1610 = vmatmul.mubr.f32.gmra.mrb[0].mxu0 %v1508
  %v1611 = vpop.f32.mrb[0].mxu0
  %v1612 = vadd.f32 0.0, %v1611
  %v1613 = vpop.f32.mrb[0].mxu0
  %1614 = vdwg.mxu0
  %v1615 = vlaneseq
  %v1616 = vshrl.u32 %v1615, 7
  %v1617 = vsub.s32 5, %v1616
  %v1618 = vrot.slane %v31, %v1617
  %v1619 = vrot.slane %v31, 3
  %v1621 = vsel %vm1113, %v1577, 0
  %v1624 = vsel %vm1113, %v1582, 0
  %v1627 = vsel %vm1113, %v1587, 0
  %v1630 = vsel %vm1113, %v1592, 0
  %v1633 = vsel %vm1113, %v1597, 0
  %v1636 = vsel %vm1113, %v1602, 0
  %v1639 = vsel %vm1113, %v1607, 0
  %v1642 = vsel %vm1113, %v1612, 0
  %v1644 = vsel %vm1126, %v1619, 0
  %1646 = vmatprep.subr.mxu0 0.0
  %1647 = vmatpush1.msra.mxu0 %v1644
  %1648 = vmatprep.subr.mxu0 0.0
  %1649 = vmatpush1.msra.mxu0 0.0
  %1650 = vmatprep.subr.mxu0 0.0
  %1651 = vmatpush1.msra.mxu0 0.0
  %1652 = vmatprep.subr.mxu0 0.0
  %1653 = vmatpush1.msra.mxu0 0.0
  %1654 = vmatprep.subr.mxu0 0.0
  %1655 = vmatpush1.msra.mxu0 0.0
  %1656 = vmatprep.subr.mxu0 0.0
  %1657 = vmatpush1.msra.mxu0 0.0
  %1658 = vmatprep.subr.mxu0 0.0
  %1659 = vmatpush1.msra.mxu0 0.0
  %1660 = vmatprep.subr.mxu0 0.0
  %1661 = vmatpush1.msra.mxu0 0.0
  %1662 = vmatprep.subr.mxu0 0.0
  %1663 = vmatpush1.msra.mxu0 0.0
  %1664 = vmatprep.subr.mxu0 0.0
  %1665 = vmatpush1.msra.mxu0 0.0
  %1666 = vmatprep.subr.mxu0 0.0
  %1667 = vmatpush1.msra.mxu0 0.0
  %1668 = vmatprep.subr.mxu0 0.0
  %1669 = vmatpush1.msra.mxu0 0.0
  %1670 = vmatprep.subr.mxu0 0.0
  %1671 = vmatpush1.msra.mxu0 0.0
  %1672 = vmatprep.subr.mxu0 0.0
  %1673 = vmatpush1.msra.mxu0 0.0
  %1674 = vmatprep.subr.mxu0 0.0
  %1675 = vmatpush1.msra.mxu0 0.0
  %1676 = vmatprep.subr.mxu0 0.0
  %1677 = vmatpush1.msra.mxu0 0.0
  %1678 = vmatprep.subr.mxu0 0.0
  %1679 = vmatpush1.msra.mxu0 0.0
  %1680 = vmatprep.subr.mxu0 0.0
  %1681 = vmatpush1.msra.mxu0 0.0
  %1682 = vmatprep.subr.mxu0 0.0
  %1683 = vmatpush1.msra.mxu0 0.0
  %1684 = vmatprep.subr.mxu0 0.0
  %1685 = vmatpush1.msra.mxu0 0.0
  %1686 = vmatprep.subr.mxu0 0.0
  %1687 = vmatpush1.msra.mxu0 0.0
  %1688 = vmatprep.subr.mxu0 0.0
  %1689 = vmatpush1.msra.mxu0 0.0
  %1690 = vmatprep.subr.mxu0 0.0
  %1691 = vmatpush1.msra.mxu0 0.0
  %1692 = vmatprep.subr.mxu0 0.0
  %1693 = vmatpush1.msra.mxu0 0.0
  %1694 = vmatprep.subr.mxu0 0.0
  %1695 = vmatpush1.msra.mxu0 0.0
  %1696 = vmatprep.subr.mxu0 0.0
  %1697 = vmatpush1.msra.mxu0 0.0
  %1698 = vmatprep.subr.mxu0 0.0
  %1699 = vmatpush1.msra.mxu0 0.0
  %1700 = vmatprep.subr.mxu0 0.0
  %1701 = vmatpush1.msra.mxu0 0.0
  %1702 = vmatprep.subr.mxu0 0.0
  %1703 = vmatpush1.msra.mxu0 0.0
  %1704 = vmatprep.subr.mxu0 0.0
  %1705 = vmatpush1.msra.mxu0 0.0
  %1706 = vmatprep.subr.mxu0 0.0
  %1707 = vmatpush1.msra.mxu0 0.0
  %1708 = vmatprep.subr.mxu0 0.0
  %1709 = vmatpush1.msra.mxu0 0.0
  %1710 = vmatprep.mubr.f32.mxu0 0.0
  %1711 = vmatmul.mubr.f32.gmra.mrb[0].mxu0 %v1621
  %v1712 = vpop.f32.mrb[0].mxu0
  %v1713 = vadd.f32 %v1618, %v1712
  %v1714 = vpop.f32.mrb[0].mxu0
  %1715 = vmatprep.mubr.f32.mxu0 0.0
  %1716 = vmatmul.mubr.f32.gmra.mrb[0].mxu0 %v1624
  %v1717 = vpop.f32.mrb[0].mxu0
  %v1718 = vadd.f32 %v1618, %v1717
  %v1719 = vpop.f32.mrb[0].mxu0
  %1720 = vmatprep.mubr.f32.mxu0 0.0
  %1721 = vmatmul.mubr.f32.gmra.mrb[0].mxu0 %v1627
  %v1722 = vpop.f32.mrb[0].mxu0
  %v1723 = vadd.f32 %v1618, %v1722
  %v1724 = vpop.f32.mrb[0].mxu0
  %1725 = vmatprep.mubr.f32.mxu0 0.0
  %1726 = vmatmul.mubr.f32.gmra.mrb[0].mxu0 %v1630
  %v1727 = vpop.f32.mrb[0].mxu0
  %v1728 = vadd.f32 %v1618, %v1727
  %v1729 = vpop.f32.mrb[0].mxu0
  %1730 = vmatprep.mubr.f32.mxu0 0.0
  %1731 = vmatmul.mubr.f32.gmra.mrb[0].mxu0 %v1633
  %v1732 = vpop.f32.mrb[0].mxu0
  %v1733 = vadd.f32 %v1618, %v1732
  %v1734 = vpop.f32.mrb[0].mxu0
  %1735 = vmatprep.mubr.f32.mxu0 0.0
  %1736 = vmatmul.mubr.f32.gmra.mrb[0].mxu0 %v1636
  %v1737 = vpop.f32.mrb[0].mxu0
  %v1738 = vadd.f32 %v1618, %v1737
  %v1739 = vpop.f32.mrb[0].mxu0
  %1740 = vmatprep.mubr.f32.mxu0 0.0
  %1741 = vmatmul.mubr.f32.gmra.mrb[0].mxu0 %v1639
  %v1742 = vpop.f32.mrb[0].mxu0
  %v1743 = vadd.f32 %v1618, %v1742
  %v1744 = vpop.f32.mrb[0].mxu0
  %1745 = vmatprep.mubr.f32.mxu0 0.0
  %1746 = vmatmul.mubr.f32.gmra.mrb[0].mxu0 %v1642
  %v1747 = vpop.f32.mrb[0].mxu0
  %v1748 = vadd.f32 %v1618, %v1747
  %v1749 = vpop.f32.mrb[0].mxu0
  %1750 = vdwg.mxu0
  %vm1751 = vcmp.eq.s32.totalorder %v488, %v364
  %v1752 = vsel %vm1751, 1, 0
  %v1753 = vcvt.s32.f32 %v1752
  %v1755 = vsel %vm1113, %v1713, 0
  %v1758 = vsel %vm1113, %v1718, 0
  %v1761 = vsel %vm1113, %v1723, 0
  %v1764 = vsel %vm1113, %v1728, 0
  %v1767 = vsel %vm1113, %v439, 0
  %v1770 = vsel %vm1113, %v440, 0
  %v1773 = vsel %vm1113, %v1733, 0
  %v1776 = vsel %vm1113, %v1738, 0
  %v1779 = vsel %vm1113, %v1743, 0
  %v1782 = vsel %vm1113, %v1748, 0
  %v1785 = vsel %vm1113, %v441, 0
  %v1788 = vsel %vm1113, %v442, 0
  %v1791 = vsel %vm1126, %v1753, 0
  %1793 = vmatprep.subr.mxu0 0.0
  %1794 = vmatpush1.msra.mxu0 %v1791
  %1795 = vmatprep.subr.mxu0 0.0
  %1796 = vmatpush1.msra.mxu0 0.0
  %1797 = vmatprep.subr.mxu0 0.0
  %1798 = vmatpush1.msra.mxu0 0.0
  %1799 = vmatprep.subr.mxu0 0.0
  %1800 = vmatpush1.msra.mxu0 0.0
  %1801 = vmatprep.subr.mxu0 0.0
  %1802 = vmatpush1.msra.mxu0 0.0
  %1803 = vmatprep.subr.mxu0 0.0
  %1804 = vmatpush1.msra.mxu0 0.0
  %1805 = vmatprep.subr.mxu0 0.0
  %1806 = vmatpush1.msra.mxu0 0.0
  %1807 = vmatprep.subr.mxu0 0.0
  %1808 = vmatpush1.msra.mxu0 0.0
  %1809 = vmatprep.subr.mxu0 0.0
  %1810 = vmatpush1.msra.mxu0 0.0
  %1811 = vmatprep.subr.mxu0 0.0
  %1812 = vmatpush1.msra.mxu0 0.0
  %1813 = vmatprep.subr.mxu0 0.0
  %1814 = vmatpush1.msra.mxu0 0.0
  %1815 = vmatprep.subr.mxu0 0.0
  %1816 = vmatpush1.msra.mxu0 0.0
  %1817 = vmatprep.subr.mxu0 0.0
  %1818 = vmatpush1.msra.mxu0 0.0
  %1819 = vmatprep.subr.mxu0 0.0
  %1820 = vmatpush1.msra.mxu0 0.0
  %1821 = vmatprep.subr.mxu0 0.0
  %1822 = vmatpush1.msra.mxu0 0.0
  %1823 = vmatprep.subr.mxu0 0.0
  %1824 = vmatpush1.msra.mxu0 0.0
  %1825 = vmatprep.subr.mxu0 0.0
  %1826 = vmatpush1.msra.mxu0 0.0
  %1827 = vmatprep.subr.mxu0 0.0
  %1828 = vmatpush1.msra.mxu0 0.0
  %1829 = vmatprep.subr.mxu0 0.0
  %1830 = vmatpush1.msra.mxu0 0.0
  %1831 = vmatprep.subr.mxu0 0.0
  %1832 = vmatpush1.msra.mxu0 0.0
  %1833 = vmatprep.subr.mxu0 0.0
  %1834 = vmatpush1.msra.mxu0 0.0
  %1835 = vmatprep.subr.mxu0 0.0
  %1836 = vmatpush1.msra.mxu0 0.0
  %1837 = vmatprep.subr.mxu0 0.0
  %1838 = vmatpush1.msra.mxu0 0.0
  %1839 = vmatprep.subr.mxu0 0.0
  %1840 = vmatpush1.msra.mxu0 0.0
  %1841 = vmatprep.subr.mxu0 0.0
  %1842 = vmatpush1.msra.mxu0 0.0
  %1843 = vmatprep.subr.mxu0 0.0
  %1844 = vmatpush1.msra.mxu0 0.0
  %1845 = vmatprep.subr.mxu0 0.0
  %1846 = vmatpush1.msra.mxu0 0.0
  %1847 = vmatprep.subr.mxu0 0.0
  %1848 = vmatpush1.msra.mxu0 0.0
  %1849 = vmatprep.subr.mxu0 0.0
  %1850 = vmatpush1.msra.mxu0 0.0
  %1851 = vmatprep.subr.mxu0 0.0
  %1852 = vmatpush1.msra.mxu0 0.0
  %1853 = vmatprep.subr.mxu0 0.0
  %1854 = vmatpush1.msra.mxu0 0.0
  %1855 = vmatprep.subr.mxu0 0.0
  %1856 = vmatpush1.msra.mxu0 0.0
  %1857 = vmatprep.mubr.f32.mxu0 0.0
  %1858 = vmatmul.mubr.f32.gmra.mrb[0].mxu0 %v1755
  %v1859 = vpop.f32.mrb[0].mxu0
  %v1860 = vadd.f32 0.0, %v1859
  %v1861 = vpop.f32.mrb[0].mxu0
  %1862 = vmatprep.mubr.f32.mxu0 0.0
  %1863 = vmatmul.mubr.f32.gmra.mrb[0].mxu0 %v1758
  %v1864 = vpop.f32.mrb[0].mxu0
  %v1865 = vadd.f32 0.0, %v1864
  %v1866 = vpop.f32.mrb[0].mxu0
  %1867 = vmatprep.mubr.f32.mxu0 0.0
  %1868 = vmatmul.mubr.f32.gmra.mrb[0].mxu0 %v1761
  %v1869 = vpop.f32.mrb[0].mxu0
  %v1870 = vadd.f32 0.0, %v1869
  %v1871 = vpop.f32.mrb[0].mxu0
  %1872 = vmatprep.mubr.f32.mxu0 0.0
  %1873 = vmatmul.mubr.f32.gmra.mrb[0].mxu0 %v1764
  %v1874 = vpop.f32.mrb[0].mxu0
  %v1875 = vadd.f32 0.0, %v1874
  %v1876 = vpop.f32.mrb[0].mxu0
  %1877 = vmatprep.mubr.f32.mxu0 0.0
  %1878 = vmatmul.mubr.f32.gmra.mrb[0].mxu0 %v1767
  %v1879 = vpop.f32.mrb[0].mxu0
  %v1880 = vadd.f32 0.0, %v1879
  %v1881 = vpop.f32.mrb[0].mxu0
  %1882 = vmatprep.mubr.f32.mxu0 0.0
  %1883 = vmatmul.mubr.f32.gmra.mrb[0].mxu0 %v1770
  %v1884 = vpop.f32.mrb[0].mxu0
  %v1885 = vadd.f32 0.0, %v1884
  %v1886 = vpop.f32.mrb[0].mxu0
  %1887 = vmatprep.mubr.f32.mxu0 0.0
  %1888 = vmatmul.mubr.f32.gmra.mrb[0].mxu0 %v1773
  %v1889 = vpop.f32.mrb[0].mxu0
  %v1890 = vadd.f32 0.0, %v1889
  %v1891 = vpop.f32.mrb[0].mxu0
  %1892 = vmatprep.mubr.f32.mxu0 0.0
  %1893 = vmatmul.mubr.f32.gmra.mrb[0].mxu0 %v1776
  %v1894 = vpop.f32.mrb[0].mxu0
  %v1895 = vadd.f32 0.0, %v1894
  %v1896 = vpop.f32.mrb[0].mxu0
  %1897 = vmatprep.mubr.f32.mxu0 0.0
  %1898 = vmatmul.mubr.f32.gmra.mrb[0].mxu0 %v1779
  %v1899 = vpop.f32.mrb[0].mxu0
  %v1900 = vadd.f32 0.0, %v1899
  %v1901 = vpop.f32.mrb[0].mxu0
  %1902 = vmatprep.mubr.f32.mxu0 0.0
  %1903 = vmatmul.mubr.f32.gmra.mrb[0].mxu0 %v1782
  %v1904 = vpop.f32.mrb[0].mxu0
  %v1905 = vadd.f32 0.0, %v1904
  %v1906 = vpop.f32.mrb[0].mxu0
  %1907 = vmatprep.mubr.f32.mxu0 0.0
  %1908 = vmatmul.mubr.f32.gmra.mrb[0].mxu0 %v1785
  %v1909 = vpop.f32.mrb[0].mxu0
  %v1910 = vadd.f32 0.0, %v1909
  %v1911 = vpop.f32.mrb[0].mxu0
  %1912 = vmatprep.mubr.f32.mxu0 0.0
  %1913 = vmatmul.mubr.f32.gmra.mrb[0].mxu0 %v1788
  %v1914 = vpop.f32.mrb[0].mxu0
  %v1915 = vadd.f32 0.0, %v1914
  %v1916 = vpop.f32.mrb[0].mxu0
  %1917 = vdwg.mxu0
  %1918 = vst [vmem:[%s2] sm:$0xff] %v1860
  %1919 = vst [vmem:[%s2 + $0x8] sm:$0xff] %v1865
  %1920 = vst [vmem:[%s2 + $0x10] sm:$0xff] %v1870
  %1921 = vst [vmem:[%s2 + $0x18] sm:$0xff] %v1875
  %1922 = vst [vmem:[%s2 + $0x20] sm:$0xff] %v1880
  %1923 = vst [vmem:[%s2 + $0x28] sm:$0xff] %v1885
  %1924 = vst [vmem:[%s2 + $0x30] sm:$0xff] %v1890
  %1925 = vst [vmem:[%s2 + $0x38] sm:$0xff] %v1895
  %1926 = vst [vmem:[%s2 + $0x40] sm:$0xff] %v1900
  %1927 = vst [vmem:[%s2 + $0x48] sm:$0xff] %v1905
  %1928 = vst [vmem:[%s2 + $0x50] sm:$0xff] %v1910
  %1929 = vst [vmem:[%s2 + $0x58] sm:$0xff] %v1915
  // Predicated region
  $region10: #{swin_deformable_attention.1} parent=0 // pred_check
    _
  $region11: #{swin_deformable_attention.1} parent=0 // pred_check_branch
    %1931 = sbr.rel (0) target = $region13
  $region12: #{swin_deformable_attention.1} parent=0 // pred_region
    _
  $region13: #{swin_deformable_attention.1} parent=0 // pred_fallthru
    _
  // Predicated region
  $region14: #{swin_deformable_attention.1} parent=0 // pred_check
    _
  $region15: #{swin_deformable_attention.1} parent=0 // pred_check_branch
    %1933 = sbr.rel (0) target = $region17
  $region16: #{swin_deformable_attention.1} parent=0 // pred_region
    _
  $region17: #{swin_deformable_attention.1} parent=0 // pred_fallthru
    _

</llo_original>
